<compile_context>
chip_gen: v7x
topology: tpu7x:2x2x1
jax: 0.10.0
libtpu: 0.0.40
codegen_flags: <defaults>
</compile_context>

<pallas_src>
import math

import jax
import jax.numpy as jnp
from jax.experimental import pallas as pl
from jax.experimental.pallas import tpu as pltpu

IN_FEATURES = 28 * 28   # 784 (kept unpadded; vreg padding to 896 is free in-core)
HIDDEN = 512
OUT_FEATURES = 10
OUT_PAD = 128           # lane-dense output width (sliced back to 10 in wrapper)
MAX_TB = 1024           # upper bound on the batch tile


def mlp_kernel(x_ref, w1_ref, b1_ref, w2_ref, b2_ref, w3_ref, b3_ref, o_ref):
    # x_ref:  (TB, 784)         f32  (cast to bf16 here -> no wrapper HBM pass)
    # w1_ref: (784, HIDDEN)     bf16   b1_ref: (1, HIDDEN)  f32
    # w2_ref: (HIDDEN, HIDDEN)  bf16   b2_ref: (1, HIDDEN)  f32
    # w3_ref: (HIDDEN, OUT_PAD) bf16   b3_ref: (1, OUT_PAD) f32
    # o_ref:  (TB, OUT_PAD)     bf16
    x = x_ref[...].astype(jnp.bfloat16)

    h1 = jnp.dot(x, w1_ref[...], preferred_element_type=jnp.float32)
    h1 = jnp.maximum(h1 + b1_ref[...], 0.0).astype(jnp.bfloat16)

    h2 = jnp.dot(h1, w2_ref[...], preferred_element_type=jnp.float32)
    h2 = jnp.maximum(h2 + b2_ref[...], 0.0).astype(jnp.bfloat16)

    logits = jnp.dot(h2, w3_ref[...], preferred_element_type=jnp.float32)
    o_ref[...] = (logits + b3_ref[...]).astype(o_ref.dtype)


def _round_up(n, m):
    return ((n + m - 1) // m) * m


def _pick_batch_tile(batch):
    """Batch tile: large (<=1024) to amortize per-step overhead, >=2 tiles when
    the batch allows (feeds both v7x TensorCores via the 'parallel' axis), and
    rounded to the 8-row sublane so tiny batches don't pay for pad rows."""
    if batch <= 8:
        return 8
    tb = _round_up((batch + 1) // 2, 8)   # aim for 2 tiles
    return min(tb, MAX_TB)


def init_linear_params(key, out_features, in_features):
    """PyTorch nn.Linear default init: U(-1/sqrt(in), 1/sqrt(in))."""
    kw, kb = jax.random.split(key)
    bound = 1.0 / math.sqrt(in_features)
    w = jax.random.uniform(
        kw, (out_features, in_features), jnp.float32, minval=-bound, maxval=bound
    )
    b = jax.random.uniform(
        kb, (out_features,), jnp.float32, minval=-bound, maxval=bound
    )
    return w, b


def prepare_params(params):
    """One-time layout prep (outside the per-call forward path): transpose to
    (in, out), cast weights to bf16, pad only the final N 10->128 (lane-dense
    stores). Biases stay f32 (added to the f32 accumulator)."""
    (w1, b1), (w2, b2), (w3, b3) = params

    w1t = w1.T.astype(jnp.bfloat16)                       # (784, 512), no K pad
    w2t = w2.T.astype(jnp.bfloat16)                       # (512, 512)
    w3t = jnp.zeros((HIDDEN, OUT_PAD), jnp.bfloat16)
    w3t = w3t.at[:, :OUT_FEATURES].set(w3.T.astype(jnp.bfloat16))

    b1r = b1.reshape(1, HIDDEN).astype(jnp.float32)
    b2r = b2.reshape(1, HIDDEN).astype(jnp.float32)
    b3r = jnp.zeros((1, OUT_PAD), jnp.float32)
    b3r = b3r.at[:, :OUT_FEATURES].set(b3.reshape(1, OUT_FEATURES))
    return (w1t, b1r, w2t, b2r, w3t, b3r)


def net_forward(x_nchw, prepared):
    w1t, b1r, w2t, b2r, w3t, b3r = prepared
    B = x_nchw.shape[0]

    # nn.Flatten(): free row-major view; stays f32, no wrapper cast or pad.
    x2d = x_nchw.reshape(B, -1)                           # (B, 784) f32

    TB = _pick_batch_tile(B)
    grid = (pl.cdiv(B, TB),)   # ragged last block: OOB reads harmless (rows are
                               # independent), boundary output stores are masked.

    const = lambda i: (0, 0)   # weights/biases: same block every step -> VMEM-resident
    out = pl.pallas_call(
        mlp_kernel,
        out_shape=jax.ShapeDtypeStruct((B, OUT_PAD), jnp.bfloat16),
        grid=grid,
        in_specs=[
            pl.BlockSpec((TB, IN_FEATURES), lambda i: (i, 0)),
            pl.BlockSpec((IN_FEATURES, HIDDEN), const),
            pl.BlockSpec((1, HIDDEN), const),
            pl.BlockSpec((HIDDEN, HIDDEN), const),
            pl.BlockSpec((1, HIDDEN), const),
            pl.BlockSpec((HIDDEN, OUT_PAD), const),
            pl.BlockSpec((1, OUT_PAD), const),
        ],
        out_specs=pl.BlockSpec((TB, OUT_PAD), lambda i: (i, 0)),
        compiler_params=pltpu.CompilerParams(
            dimension_semantics=("parallel",),           # shards batch tiles across TCs
            vmem_limit_bytes=32 * 1024 * 1024,           # ample for all gens incl. v7x
        ),
    )(x2d, w1t, b1r, w2t, b2r, w3t, b3r)

    # Drop the lane padding of the last layer; restore f32 logits for callers.
    return out[:, :OUT_FEATURES].astype(jnp.float32)


if __name__ == "__main__":
    key = jax.random.PRNGKey(0)
    k_x, k1, k2, k3 = jax.random.split(key, 4)

    # Small MNIST-like input: batch=2, NCHW (2, 1, 28, 28)
    x = jax.random.normal(k_x, (2, 1, 28, 28), dtype=jnp.float32)

    params = (
        init_linear_params(k1, HIDDEN, IN_FEATURES),
        init_linear_params(k2, HIDDEN, HIDDEN),
        init_linear_params(k3, OUT_FEATURES, HIDDEN),
    )
    prepared = prepare_params(params)

    logits = jax.jit(net_forward)(x, prepared)
    logits = jax.block_until_ready(logits)

    # Pure-JAX reference with the same bf16 quantization of x / weights so the
    # comparison isolates kernel correctness (intermediates kept f32 here).
    (w1, b1), (w2, b2), (w3, b3) = params
    xf = x.reshape(x.shape[0], -1).astype(jnp.bfloat16).astype(jnp.float32)
    w1f = w1.astype(jnp.bfloat16).astype(jnp.float32)
    w2f = w2.astype(jnp.bfloat16).astype(jnp.float32)
    w3f = w3.astype(jnp.bfloat16).astype(jnp.float32)
    ref = jnp.maximum(xf @ w1f.T + b1, 0.0)
    ref = jnp.maximum(ref @ w2f.T + b2, 0.0)
    ref = ref @ w3f.T + b3

    assert logits.shape == (2, 10)
    assert jnp.allclose(logits, ref, atol=5e-2, rtol=5e-2), (
        float(jnp.max(jnp.abs(logits - ref))))

    print("KERNEL_OK")
</pallas_src>

<mosaic_0001>
module attributes {stable_mosaic.version = 11 : i64} {
  func.func @mlp_kernel(%arg0: i32, %arg1: memref<8x784xf32, #tpu.memory_space<vmem>>, %arg2: memref<784x512xbf16, #tpu.memory_space<vmem>>, %arg3: memref<1x512xf32, #tpu.memory_space<vmem>>, %arg4: memref<512x512xbf16, #tpu.memory_space<vmem>>, %arg5: memref<1x512xf32, #tpu.memory_space<vmem>>, %arg6: memref<512x128xbf16, #tpu.memory_space<vmem>>, %arg7: memref<1x128xf32, #tpu.memory_space<vmem>>, %arg8: memref<8x128xbf16, #tpu.memory_space<vmem>>) attributes {dimension_semantics = [#tpu.dimension_semantics<parallel>], iteration_bounds = array<i64: 1>, scalar_prefetch = 0 : i64, scratch_operands = 0 : i64, tpu.core_type = #tpu.core_type<tc>, window_params = [{transform_indices = @transform_0, window_bounds = array<i64: 8, 784>}, {pipeline_mode = #tpu.pipeline_mode<synchronous>, transform_indices = @transform_1, window_bounds = array<i64: 784, 512>}, {pipeline_mode = #tpu.pipeline_mode<synchronous>, transform_indices = @transform_2, window_bounds = array<i64: 1, 512>}, {pipeline_mode = #tpu.pipeline_mode<synchronous>, transform_indices = @transform_3, window_bounds = array<i64: 512, 512>}, {pipeline_mode = #tpu.pipeline_mode<synchronous>, transform_indices = @transform_4, window_bounds = array<i64: 1, 512>}, {pipeline_mode = #tpu.pipeline_mode<synchronous>, transform_indices = @transform_5, window_bounds = array<i64: 512, 128>}, {pipeline_mode = #tpu.pipeline_mode<synchronous>, transform_indices = @transform_6, window_bounds = array<i64: 1, 128>}, {transform_indices = @transform_7, window_bounds = array<i64: 8, 128>}]} {
    %c0 = arith.constant 0 : index
    %c0_0 = arith.constant 0 : index
    %0 = vector.load %arg1[%c0, %c0_0] : memref<8x784xf32, #tpu.memory_space<vmem>>, vector<8x784xf32>
    %1 = arith.truncf %0 : vector<8x784xf32> to vector<8x784xbf16>
    %c0_1 = arith.constant 0 : index
    %c0_2 = arith.constant 0 : index
    %2 = vector.load %arg2[%c0_1, %c0_2] : memref<784x512xbf16, #tpu.memory_space<vmem>>, vector<784x512xbf16>
    %cst = arith.constant dense<0.000000e+00> : vector<8x512xf32>
    %3 = tpu.matmul %1, %2, %cst {dimension_numbers = #tpu.dot_dimension_numbers<[1], [0], [0], [1], [0, 0, 1, 1], [], []>} : vector<8x784xbf16>, vector<784x512xbf16>, vector<8x512xf32> -> vector<8x512xf32>
    %c0_3 = arith.constant 0 : index
    %c0_4 = arith.constant 0 : index
    %4 = vector.load %arg3[%c0_3, %c0_4] : memref<1x512xf32, #tpu.memory_space<vmem>>, vector<1x512xf32>
    %5 = vector.broadcast %4 : vector<1x512xf32> to vector<8x512xf32>
    %6 = arith.addf %3, %5 : vector<8x512xf32>
    %cst_5 = arith.constant 0.000000e+00 : f32
    %7 = vector.broadcast %cst_5 : f32 to vector<8x512xf32>
    %8 = arith.maximumf %6, %7 : vector<8x512xf32>
    %9 = arith.truncf %8 : vector<8x512xf32> to vector<8x512xbf16>
    %c0_6 = arith.constant 0 : index
    %c0_7 = arith.constant 0 : index
    %10 = vector.load %arg4[%c0_6, %c0_7] : memref<512x512xbf16, #tpu.memory_space<vmem>>, vector<512x512xbf16>
    %cst_8 = arith.constant dense<0.000000e+00> : vector<8x512xf32>
    %11 = tpu.matmul %9, %10, %cst_8 {dimension_numbers = #tpu.dot_dimension_numbers<[1], [0], [0], [1], [0, 0, 1, 1], [], []>} : vector<8x512xbf16>, vector<512x512xbf16>, vector<8x512xf32> -> vector<8x512xf32>
    %c0_9 = arith.constant 0 : index
    %c0_10 = arith.constant 0 : index
    %12 = vector.load %arg5[%c0_9, %c0_10] : memref<1x512xf32, #tpu.memory_space<vmem>>, vector<1x512xf32>
    %13 = vector.broadcast %12 : vector<1x512xf32> to vector<8x512xf32>
    %14 = arith.addf %11, %13 : vector<8x512xf32>
    %cst_11 = arith.constant 0.000000e+00 : f32
    %15 = vector.broadcast %cst_11 : f32 to vector<8x512xf32>
    %16 = arith.maximumf %14, %15 : vector<8x512xf32>
    %17 = arith.truncf %16 : vector<8x512xf32> to vector<8x512xbf16>
    %c0_12 = arith.constant 0 : index
    %c0_13 = arith.constant 0 : index
    %18 = vector.load %arg6[%c0_12, %c0_13] : memref<512x128xbf16, #tpu.memory_space<vmem>>, vector<512x128xbf16>
    %cst_14 = arith.constant dense<0.000000e+00> : vector<8x128xf32>
    %19 = tpu.matmul %17, %18, %cst_14 {dimension_numbers = #tpu.dot_dimension_numbers<[1], [0], [0], [1], [0, 0, 1, 1], [], []>} : vector<8x512xbf16>, vector<512x128xbf16>, vector<8x128xf32> -> vector<8x128xf32>
    %c0_15 = arith.constant 0 : index
    %c0_16 = arith.constant 0 : index
    %20 = vector.load %arg7[%c0_15, %c0_16] : memref<1x128xf32, #tpu.memory_space<vmem>>, vector<1x128xf32>
    %21 = vector.broadcast %20 : vector<1x128xf32> to vector<8x128xf32>
    %22 = arith.addf %19, %21 : vector<8x128xf32>
    %23 = arith.truncf %22 : vector<8x128xf32> to vector<8x128xbf16>
    %c0_17 = arith.constant 0 : index
    %c0_18 = arith.constant 0 : index
    %24 = vector.load %arg8[%c0_17, %c0_18] : memref<8x128xbf16, #tpu.memory_space<vmem>>, vector<8x128xbf16>
    tpu.vector_store %arg8[%c0_17, %c0_18], %23 {strides = array<i32>} : memref<8x128xbf16, #tpu.memory_space<vmem>>, vector<8x128xbf16>,
    return
  }
  func.func @transform_0(%arg0: i32) -> (i32, i32) {
    %c0_i32 = arith.constant 0 : i32
    %c0_i32_0 = arith.constant 0 : i32
    return %arg0, %c0_i32 : i32, i32
  }
  func.func @transform_1(%arg0: i32) -> (i32, i32) {
    %c0_i32 = arith.constant 0 : i32
    %c0_i32_0 = arith.constant 0 : i32
    %c0_i32_1 = arith.constant 0 : i32
    return %c0_i32, %c0_i32_0 : i32, i32
  }
  func.func @transform_2(%arg0: i32) -> (i32, i32) {
    %c0_i32 = arith.constant 0 : i32
    %c0_i32_0 = arith.constant 0 : i32
    %c0_i32_1 = arith.constant 0 : i32
    return %c0_i32, %c0_i32_0 : i32, i32
  }
  func.func @transform_3(%arg0: i32) -> (i32, i32) {
    %c0_i32 = arith.constant 0 : i32
    %c0_i32_0 = arith.constant 0 : i32
    %c0_i32_1 = arith.constant 0 : i32
    return %c0_i32, %c0_i32_0 : i32, i32
  }
  func.func @transform_4(%arg0: i32) -> (i32, i32) {
    %c0_i32 = arith.constant 0 : i32
    %c0_i32_0 = arith.constant 0 : i32
    %c0_i32_1 = arith.constant 0 : i32
    return %c0_i32, %c0_i32_0 : i32, i32
  }
  func.func @transform_5(%arg0: i32) -> (i32, i32) {
    %c0_i32 = arith.constant 0 : i32
    %c0_i32_0 = arith.constant 0 : i32
    %c0_i32_1 = arith.constant 0 : i32
    return %c0_i32, %c0_i32_0 : i32, i32
  }
  func.func @transform_6(%arg0: i32) -> (i32, i32) {
    %c0_i32 = arith.constant 0 : i32
    %c0_i32_0 = arith.constant 0 : i32
    %c0_i32_1 = arith.constant 0 : i32
    return %c0_i32, %c0_i32_0 : i32, i32
  }
  func.func @transform_7(%arg0: i32) -> (i32, i32) {
    %c0_i32 = arith.constant 0 : i32
    %c0_i32_0 = arith.constant 0 : i32
    return %arg0, %c0_i32 : i32, i32
  }
}

</mosaic_0001>

<llo_original>
// kernel: net_forward.1
$region0: #{net_forward.1}
  #allocation0 [shape = 'u32[]', space=smem, size = 0x4, offset = 0x4, fixed_abs, tag = 'smem constant byte address 0x4 - core index']
  #allocation1 [shape = 'u32[144,128]{1,0:T(1,128)}', space=vmem, size = 0x12000, scoped, tag = 'internal scratch']
  %s0 = inlined_call_operand.vmem [shape: f32[2,784], index: 0, kind: input, shape index: {}]
  %s1 = inlined_call_operand.hbm [shape: bf16[784,512], index: 1, kind: input, shape index: {}]
  %s2 = inlined_call_operand.vmem [shape: f32[1,512], index: 2, kind: input, shape index: {}]
  %s3 = inlined_call_operand.hbm [shape: bf16[512,512], index: 3, kind: input, shape index: {}]
  %s4 = inlined_call_operand.vmem [shape: f32[1,512], index: 4, kind: input, shape index: {}]
  %s5 = inlined_call_operand.hbm [shape: bf16[512,128], index: 5, kind: input, shape index: {}]
  %s6 = inlined_call_operand.vmem [shape: f32[1,128], index: 6, kind: input, shape index: {}]
  %s7 = inlined_call_operand.vmem [shape: bf16[2,128], index: 7, kind: output, shape index: {}]
  %s8 = sld [smem:[#allocation0]]
  $region80: #{net_forward.1} parent=0
    _
  %s10 = ssub.s32 1, %s8
  %s11 = scalar_select 0, %s10, %s8
  $region1: #{net_forward.1} parent=0
    #allocation2 [shape = 'u8[802816]{0}', space=vmem, size = 0xc4000, scoped, tag = 'input window, operand 1, single buffered']
    #allocation3 [shape = 's32[1]{0}', space=sflag, size = 0x4, scoped, tag = 'scoped memory for net_forward.1']
    #allocation4 [shape = 'u8[524288]{0}', space=vmem, size = 0x80000, scoped, tag = 'input window, operand 3, single buffered']
    #allocation5 [shape = 's32[1]{0}', space=sflag, size = 0x4, scoped, tag = 'scoped memory for net_forward.1']
    #allocation6 [shape = 'u8[131072]{0}', space=vmem, size = 0x20000, scoped, tag = 'input window, operand 5, single buffered']
    #allocation7 [shape = 'u8[2048]{0}', space=vmem, size = 0x800, scoped, tag = 'output window, operand 0, single buffered']
    %12 = vsyncpa [#allocation3], 0
    %13 = vsyncpa [#allocation5], 0
    // Predicated region
    $region2: #{net_forward.1} parent=1 // pred_check
      _
    $region3: #{net_forward.1} parent=1 // pred_check_branch
      %15 = sbr.rel (0) target = $region5
    $region4: #{net_forward.1} parent=1 // pred_region
      _
    $region5: #{net_forward.1} parent=1 // pred_fallthru
      _
    // Predicated region
    $region6: #{net_forward.1} parent=1 // pred_check
      _
    $region7: #{net_forward.1} parent=1 // pred_check_branch
      %17 = sbr.rel (0) target = $region9
    $region8: #{net_forward.1} parent=1 // pred_region
      %s19 = ssub.s32 25088, 25088
      %20 = vsyncadd [#allocation3], %s19
      %s21 = sshll.u32 [#allocation2], 4
      %s22 = int_to_ptr.vmem [resolvable:$true] %s21
      %27 = dma.hbm_to_vmem [thread:$0]  %s1, 25088, %s22, [#allocation3], 256, 256, 16
    $region9: #{net_forward.1} parent=1 // pred_fallthru
      _
    // Predicated region
    $region10: #{net_forward.1} parent=1 // pred_check
      _
    $region11: #{net_forward.1} parent=1 // pred_check_branch
      %29 = sbr.rel (0) target = $region13
    $region12: #{net_forward.1} parent=1 // pred_region
      _
    $region13: #{net_forward.1} parent=1 // pred_fallthru
      _
    // Predicated region
    $region14: #{net_forward.1} parent=1 // pred_check
      _
    $region15: #{net_forward.1} parent=1 // pred_check_branch
      %31 = sbr.rel (0) target = $region17
    $region16: #{net_forward.1} parent=1 // pred_region
      %s33 = ssub.s32 16384, 16384
      %34 = vsyncadd [#allocation5], %s33
      %s35 = sshll.u32 [#allocation4], 4
      %s36 = int_to_ptr.vmem [resolvable:$true] %s35
      %41 = dma.hbm_to_vmem [thread:$0]  %s3, 16384, %s36, [#allocation5], 256, 256, 16
    $region17: #{net_forward.1} parent=1 // pred_fallthru
      _
    // Predicated region
    $region18: #{net_forward.1} parent=1 // pred_check
      _
    $region19: #{net_forward.1} parent=1 // pred_check_branch
      %43 = sbr.rel (0) target = $region21
    $region20: #{net_forward.1} parent=1 // pred_region
      _
    $region21: #{net_forward.1} parent=1 // pred_fallthru
      _
    // Predicated region
    $region22: #{net_forward.1} parent=1 // pred_check
      _
    $region23: #{net_forward.1} parent=1 // pred_check_branch
      %45 = sbr.rel (0) target = $region25
    $region24: #{net_forward.1} parent=1 // pred_region
      %s47 = ssub.s32 4096, 4096
      %48 = vsyncadd [#allocation5], %s47
      %s49 = sshll.u32 [#allocation6], 4
      %s50 = int_to_ptr.vmem [resolvable:$true] %s49
      %55 = dma.hbm_to_vmem [thread:$0]  %s5, 4096, %s50, [#allocation5], 64, 64, 4
    $region25: #{net_forward.1} parent=1 // pred_fallthru
      _
    // Predicated region
    $region26: #{net_forward.1} parent=1 // pred_check
      _
    $region27: #{net_forward.1} parent=1 // pred_check_branch
      %57 = sbr.rel (0) target = $region29
    $region28: #{net_forward.1} parent=1 // pred_region
      _
    $region29: #{net_forward.1} parent=1 // pred_fallthru
      _
    // Predicated region
    $region30: #{net_forward.1} parent=1 // pred_check
      _
    $region31: #{net_forward.1} parent=1 // pred_check_branch
      %59 = sbr.rel (0) target = $region33
    $region32: #{net_forward.1} parent=1 // pred_region
      %60 = dma.done [#allocation3], 25088
    $region33: #{net_forward.1} parent=1 // pred_fallthru
      _
    // Predicated region
    $region34: #{net_forward.1} parent=1 // pred_check
      _
    $region35: #{net_forward.1} parent=1 // pred_check_branch
      %62 = sbr.rel (0) target = $region37
    $region36: #{net_forward.1} parent=1 // pred_region
      %63 = dma.done [#allocation5], 16384
    $region37: #{net_forward.1} parent=1 // pred_fallthru
      _
    // Predicated region
    $region38: #{net_forward.1} parent=1 // pred_check
      _
    $region39: #{net_forward.1} parent=1 // pred_check_branch
      %65 = sbr.rel (0) target = $region41
    $region40: #{net_forward.1} parent=1 // pred_region
      %66 = dma.done [#allocation5], 4096
    $region41: #{net_forward.1} parent=1 // pred_fallthru
      _
    %v68 = vld [vmem:[%s0] sm:$0xff]
    %v69 = vld [vmem:[%s0 + $0x8] sm:$0x3f]
    %v70 = vld [vmem:[%s0 + $0xe] sm:$0xff]
    %v71 = vld [vmem:[%s0 + $0x16] sm:$0x3f]
    %v72 = vld [vmem:[%s0 + $0x1c] sm:$0xff]
    %v73 = vld [vmem:[%s0 + $0x24] sm:$0x3f]
    %v74 = vld [vmem:[%s0 + $0x2a] sm:$0xff]
    %v75 = vld [vmem:[%s0 + $0x32] sm:$0x3f]
    %v84 = vcombine.low %v68, %v70
    %v85 = vcombine.high %v68, %v70
    %v86 = vcombine.low %v72, %v74
    %v87 = vcombine.high %v72, %v74
    %v89 = vunpack.c.l.s4 1983009808
    %v90 = vunpack.c.0.s8 %v89
    %v91 = vlaneseq
    %v92 = vshrl.u32 %v91, 7
    %v93 = vsub.s32 %v90, %v92
    %v94 = vrot.slane %v84, %v93
    %v96 = vunpack.c.l.s4 1983009808
    %v97 = vunpack.c.0.s8 %v96
    %v98 = vlaneseq
    %v99 = vshrl.u32 %v98, 7
    %v100 = vsub.s32 %v97, %v99
    %v101 = vrot.slane %v85, %v100
    %v103 = vunpack.c.l.s4 1983009808
    %v104 = vunpack.c.0.s8 %v103
    %v105 = vlaneseq
    %v106 = vshrl.u32 %v105, 7
    %v107 = vsub.s32 %v104, %v106
    %v108 = vrot.slane %v86, %v107
    %v110 = vunpack.c.l.s4 1983009808
    %v111 = vunpack.c.0.s8 %v110
    %v112 = vlaneseq
    %v113 = vshrl.u32 %v112, 7
    %v114 = vsub.s32 %v111, %v113
    %v115 = vrot.slane %v87, %v114
    %v116 = vcombine.low %v94, %v108
    %v117 = vcombine.high %v94, %v108
    %v118 = vcombine.low %v101, %v115
    %v119 = vcombine.high %v101, %v115
    %v120 = vcombine.low %v69, %v71
    %v121 = vcombine.high %v69, %v71
    %v122 = vcombine.low %v73, %v75
    %v123 = vcombine.high %v73, %v75
    %v125 = vunpack.c.l.s4 1983009808
    %v126 = vunpack.c.0.s8 %v125
    %v127 = vlaneseq
    %v128 = vshrl.u32 %v127, 7
    %v129 = vsub.s32 %v126, %v128
    %v130 = vrot.slane %v120, %v129
    %v132 = vunpack.c.l.s4 1983009808
    %v133 = vunpack.c.0.s8 %v132
    %v134 = vlaneseq
    %v135 = vshrl.u32 %v134, 7
    %v136 = vsub.s32 %v133, %v135
    %v137 = vrot.slane %v121, %v136
    %v139 = vunpack.c.l.s4 1983009808
    %v140 = vunpack.c.0.s8 %v139
    %v141 = vlaneseq
    %v142 = vshrl.u32 %v141, 7
    %v143 = vsub.s32 %v140, %v142
    %v144 = vrot.slane %v122, %v143
    %v146 = vunpack.c.l.s4 1983009808
    %v147 = vunpack.c.0.s8 %v146
    %v148 = vlaneseq
    %v149 = vshrl.u32 %v148, 7
    %v150 = vsub.s32 %v147, %v149
    %v151 = vrot.slane %v123, %v150
    %v152 = vcombine.low %v130, %v144
    %v153 = vcombine.high %v130, %v144
    %v154 = vcombine.low %v137, %v151
    %v162 = vpack.c.bf16 %v116, %v116
    %v163 = vpack.c.bf16 %v117, %v117
    %v164 = vpack.c.bf16 %v118, %v118
    %v165 = vpack.c.bf16 %v119, %v119
    %v166 = vpack.c.bf16 %v152, %v152
    %v167 = vpack.c.bf16 %v153, %v153
    %v168 = vpack.c.bf16 %v154, %v154
    %v169 = vld [vmem:[#allocation2] sm:$0xff]
    %v170 = vld [vmem:[#allocation2 + $0x8] sm:$0xff]
    %v171 = vld [vmem:[#allocation2 + $0x10] sm:$0xff]
    %v172 = vld [vmem:[#allocation2 + $0x18] sm:$0xff]
    %v173 = vld [vmem:[#allocation2 + $0x20] sm:$0xff]
    %v174 = vld [vmem:[#allocation2 + $0x28] sm:$0xff]
    %v175 = vld [vmem:[#allocation2 + $0x30] sm:$0xff]
    %v176 = vld [vmem:[#allocation2 + $0x38] sm:$0xff]
    %v177 = vld [vmem:[#allocation2 + $0x40] sm:$0xff]
    %v178 = vld [vmem:[#allocation2 + $0x48] sm:$0xff]
    %v179 = vld [vmem:[#allocation2 + $0x50] sm:$0xff]
    %v180 = vld [vmem:[#allocation2 + $0x58] sm:$0xff]
    %v181 = vld [vmem:[#allocation2 + $0x60] sm:$0xff]
    %v182 = vld [vmem:[#allocation2 + $0x68] sm:$0xff]
    %v183 = vld [vmem:[#allocation2 + $0x70] sm:$0xff]
    %v184 = vld [vmem:[#allocation2 + $0x78] sm:$0xff]
    %v185 = vld [vmem:[#allocation2 + $0x80] sm:$0xff]
    %v186 = vld [vmem:[#allocation2 + $0x88] sm:$0xff]
    %v187 = vld [vmem:[#allocation2 + $0x90] sm:$0xff]
    %v188 = vld [vmem:[#allocation2 + $0x98] sm:$0xff]
    %v189 = vld [vmem:[#allocation2 + $0xa0] sm:$0xff]
    %v190 = vld [vmem:[#allocation2 + $0xa8] sm:$0xff]
    %v191 = vld [vmem:[#allocation2 + $0xb0] sm:$0xff]
    %v192 = vld [vmem:[#allocation2 + $0xb8] sm:$0xff]
    %v193 = vld [vmem:[#allocation2 + $0xc0] sm:$0xff]
    %v194 = vld [vmem:[#allocation2 + $0xc8] sm:$0xff]
    %v195 = vld [vmem:[#allocation2 + $0xd0] sm:$0xff]
    %v196 = vld [vmem:[#allocation2 + $0xd8] sm:$0xff]
    %v197 = vld [vmem:[#allocation2 + $0xe0] sm:$0xff]
    %v198 = vld [vmem:[#allocation2 + $0xe8] sm:$0xff]
    %v199 = vld [vmem:[#allocation2 + $0xf0] sm:$0xff]
    %v200 = vld [vmem:[#allocation2 + $0xf8] sm:$0xff]
    %v201 = vld [vmem:[#allocation2 + $0x100] sm:$0xff]
    %v202 = vld [vmem:[#allocation2 + $0x108] sm:$0xff]
    %v203 = vld [vmem:[#allocation2 + $0x110] sm:$0xff]
    %v204 = vld [vmem:[#allocation2 + $0x118] sm:$0xff]
    %v205 = vld [vmem:[#allocation2 + $0x120] sm:$0xff]
    %v206 = vld [vmem:[#allocation2 + $0x128] sm:$0xff]
    %v207 = vld [vmem:[#allocation2 + $0x130] sm:$0xff]
    %v208 = vld [vmem:[#allocation2 + $0x138] sm:$0xff]
    %v209 = vld [vmem:[#allocation2 + $0x140] sm:$0xff]
    %v210 = vld [vmem:[#allocation2 + $0x148] sm:$0xff]
    %v211 = vld [vmem:[#allocation2 + $0x150] sm:$0xff]
    %v212 = vld [vmem:[#allocation2 + $0x158] sm:$0xff]
    %v213 = vld [vmem:[#allocation2 + $0x160] sm:$0xff]
    %v214 = vld [vmem:[#allocation2 + $0x168] sm:$0xff]
    %v215 = vld [vmem:[#allocation2 + $0x170] sm:$0xff]
    %v216 = vld [vmem:[#allocation2 + $0x178] sm:$0xff]
    %v217 = vld [vmem:[#allocation2 + $0x180] sm:$0xff]
    %v218 = vld [vmem:[#allocation2 + $0x188] sm:$0xff]
    %v219 = vld [vmem:[#allocation2 + $0x190] sm:$0xff]
    %v220 = vld [vmem:[#allocation2 + $0x198] sm:$0xff]
    %v221 = vld [vmem:[#allocation2 + $0x1a0] sm:$0xff]
    %v222 = vld [vmem:[#allocation2 + $0x1a8] sm:$0xff]
    %v223 = vld [vmem:[#allocation2 + $0x1b0] sm:$0xff]
    %v224 = vld [vmem:[#allocation2 + $0x1b8] sm:$0xff]
    %v225 = vld [vmem:[#allocation2 + $0x1c0] sm:$0xff]
    %v226 = vld [vmem:[#allocation2 + $0x1c8] sm:$0xff]
    %v227 = vld [vmem:[#allocation2 + $0x1d0] sm:$0xff]
    %v228 = vld [vmem:[#allocation2 + $0x1d8] sm:$0xff]
    %v229 = vld [vmem:[#allocation2 + $0x1e0] sm:$0xff]
    %v230 = vld [vmem:[#allocation2 + $0x1e8] sm:$0xff]
    %v231 = vld [vmem:[#allocation2 + $0x1f0] sm:$0xff]
    %v232 = vld [vmem:[#allocation2 + $0x1f8] sm:$0xff]
    %v233 = vld [vmem:[#allocation2 + $0x200] sm:$0xff]
    %v234 = vld [vmem:[#allocation2 + $0x208] sm:$0xff]
    %v235 = vld [vmem:[#allocation2 + $0x210] sm:$0xff]
    %v236 = vld [vmem:[#allocation2 + $0x218] sm:$0xff]
    %v237 = vld [vmem:[#allocation2 + $0x220] sm:$0xff]
    %v238 = vld [vmem:[#allocation2 + $0x228] sm:$0xff]
    %v239 = vld [vmem:[#allocation2 + $0x230] sm:$0xff]
    %v240 = vld [vmem:[#allocation2 + $0x238] sm:$0xff]
    %v241 = vld [vmem:[#allocation2 + $0x240] sm:$0xff]
    %v242 = vld [vmem:[#allocation2 + $0x248] sm:$0xff]
    %v243 = vld [vmem:[#allocation2 + $0x250] sm:$0xff]
    %v244 = vld [vmem:[#allocation2 + $0x258] sm:$0xff]
    %v245 = vld [vmem:[#allocation2 + $0x260] sm:$0xff]
    %v246 = vld [vmem:[#allocation2 + $0x268] sm:$0xff]
    %v247 = vld [vmem:[#allocation2 + $0x270] sm:$0xff]
    %v248 = vld [vmem:[#allocation2 + $0x278] sm:$0xff]
    %v249 = vld [vmem:[#allocation2 + $0x280] sm:$0xff]
    %v250 = vld [vmem:[#allocation2 + $0x288] sm:$0xff]
    %v251 = vld [vmem:[#allocation2 + $0x290] sm:$0xff]
    %v252 = vld [vmem:[#allocation2 + $0x298] sm:$0xff]
    %v253 = vld [vmem:[#allocation2 + $0x2a0] sm:$0xff]
    %v254 = vld [vmem:[#allocation2 + $0x2a8] sm:$0xff]
    %v255 = vld [vmem:[#allocation2 + $0x2b0] sm:$0xff]
    %v256 = vld [vmem:[#allocation2 + $0x2b8] sm:$0xff]
    %v257 = vld [vmem:[#allocation2 + $0x2c0] sm:$0xff]
    %v258 = vld [vmem:[#allocation2 + $0x2c8] sm:$0xff]
    %v259 = vld [vmem:[#allocation2 + $0x2d0] sm:$0xff]
    %v260 = vld [vmem:[#allocation2 + $0x2d8] sm:$0xff]
    %v261 = vld [vmem:[#allocation2 + $0x2e0] sm:$0xff]
    %v262 = vld [vmem:[#allocation2 + $0x2e8] sm:$0xff]
    %v263 = vld [vmem:[#allocation2 + $0x2f0] sm:$0xff]
    %v264 = vld [vmem:[#allocation2 + $0x2f8] sm:$0xff]
    %v265 = vld [vmem:[#allocation2 + $0x300] sm:$0xff]
    %v266 = vld [vmem:[#allocation2 + $0x308] sm:$0xff]
    %v267 = vld [vmem:[#allocation2 + $0x310] sm:$0xff]
    %v268 = vld [vmem:[#allocation2 + $0x318] sm:$0xff]
    %v269 = vld [vmem:[#allocation2 + $0x320] sm:$0xff]
    %v270 = vld [vmem:[#allocation2 + $0x328] sm:$0xff]
    %v271 = vld [vmem:[#allocation2 + $0x330] sm:$0xff]
    %v272 = vld [vmem:[#allocation2 + $0x338] sm:$0xff]
    %v273 = vld [vmem:[#allocation2 + $0x340] sm:$0xff]
    %v274 = vld [vmem:[#allocation2 + $0x348] sm:$0xff]
    %v275 = vld [vmem:[#allocation2 + $0x350] sm:$0xff]
    %v276 = vld [vmem:[#allocation2 + $0x358] sm:$0xff]
    %v277 = vld [vmem:[#allocation2 + $0x360] sm:$0xff]
    %v278 = vld [vmem:[#allocation2 + $0x368] sm:$0xff]
    %v279 = vld [vmem:[#allocation2 + $0x370] sm:$0xff]
    %v280 = vld [vmem:[#allocation2 + $0x378] sm:$0xff]
    %v281 = vld [vmem:[#allocation2 + $0x380] sm:$0xff]
    %v282 = vld [vmem:[#allocation2 + $0x388] sm:$0xff]
    %v283 = vld [vmem:[#allocation2 + $0x390] sm:$0xff]
    %v284 = vld [vmem:[#allocation2 + $0x398] sm:$0xff]
    %v285 = vld [vmem:[#allocation2 + $0x3a0] sm:$0xff]
    %v286 = vld [vmem:[#allocation2 + $0x3a8] sm:$0xff]
    %v287 = vld [vmem:[#allocation2 + $0x3b0] sm:$0xff]
    %v288 = vld [vmem:[#allocation2 + $0x3b8] sm:$0xff]
    %v289 = vld [vmem:[#allocation2 + $0x3c0] sm:$0xff]
    %v290 = vld [vmem:[#allocation2 + $0x3c8] sm:$0xff]
    %v291 = vld [vmem:[#allocation2 + $0x3d0] sm:$0xff]
    %v292 = vld [vmem:[#allocation2 + $0x3d8] sm:$0xff]
    %v293 = vld [vmem:[#allocation2 + $0x3e0] sm:$0xff]
    %v294 = vld [vmem:[#allocation2 + $0x3e8] sm:$0xff]
    %v295 = vld [vmem:[#allocation2 + $0x3f0] sm:$0xff]
    %v296 = vld [vmem:[#allocation2 + $0x3f8] sm:$0xff]
    %v297 = vld [vmem:[#allocation2 + $0x400] sm:$0xff]
    %v298 = vld [vmem:[#allocation2 + $0x408] sm:$0xff]
    %v299 = vld [vmem:[#allocation2 + $0x410] sm:$0xff]
    %v300 = vld [vmem:[#allocation2 + $0x418] sm:$0xff]
    %v301 = vld [vmem:[#allocation2 + $0x420] sm:$0xff]
    %v302 = vld [vmem:[#allocation2 + $0x428] sm:$0xff]
    %v303 = vld [vmem:[#allocation2 + $0x430] sm:$0xff]
    %v304 = vld [vmem:[#allocation2 + $0x438] sm:$0xff]
    %v305 = vld [vmem:[#allocation2 + $0x440] sm:$0xff]
    %v306 = vld [vmem:[#allocation2 + $0x448] sm:$0xff]
    %v307 = vld [vmem:[#allocation2 + $0x450] sm:$0xff]
    %v308 = vld [vmem:[#allocation2 + $0x458] sm:$0xff]
    %v309 = vld [vmem:[#allocation2 + $0x460] sm:$0xff]
    %v310 = vld [vmem:[#allocation2 + $0x468] sm:$0xff]
    %v311 = vld [vmem:[#allocation2 + $0x470] sm:$0xff]
    %v312 = vld [vmem:[#allocation2 + $0x478] sm:$0xff]
    %v313 = vld [vmem:[#allocation2 + $0x480] sm:$0xff]
    %v314 = vld [vmem:[#allocation2 + $0x488] sm:$0xff]
    %v315 = vld [vmem:[#allocation2 + $0x490] sm:$0xff]
    %v316 = vld [vmem:[#allocation2 + $0x498] sm:$0xff]
    %v317 = vld [vmem:[#allocation2 + $0x4a0] sm:$0xff]
    %v318 = vld [vmem:[#allocation2 + $0x4a8] sm:$0xff]
    %v319 = vld [vmem:[#allocation2 + $0x4b0] sm:$0xff]
    %v320 = vld [vmem:[#allocation2 + $0x4b8] sm:$0xff]
    %v321 = vld [vmem:[#allocation2 + $0x4c0] sm:$0xff]
    %v322 = vld [vmem:[#allocation2 + $0x4c8] sm:$0xff]
    %v323 = vld [vmem:[#allocation2 + $0x4d0] sm:$0xff]
    %v324 = vld [vmem:[#allocation2 + $0x4d8] sm:$0xff]
    %v325 = vld [vmem:[#allocation2 + $0x4e0] sm:$0xff]
    %v326 = vld [vmem:[#allocation2 + $0x4e8] sm:$0xff]
    %v327 = vld [vmem:[#allocation2 + $0x4f0] sm:$0xff]
    %v328 = vld [vmem:[#allocation2 + $0x4f8] sm:$0xff]
    %v329 = vld [vmem:[#allocation2 + $0x500] sm:$0xff]
    %v330 = vld [vmem:[#allocation2 + $0x508] sm:$0xff]
    %v331 = vld [vmem:[#allocation2 + $0x510] sm:$0xff]
    %v332 = vld [vmem:[#allocation2 + $0x518] sm:$0xff]
    %v333 = vld [vmem:[#allocation2 + $0x520] sm:$0xff]
    %v334 = vld [vmem:[#allocation2 + $0x528] sm:$0xff]
    %v335 = vld [vmem:[#allocation2 + $0x530] sm:$0xff]
    %v336 = vld [vmem:[#allocation2 + $0x538] sm:$0xff]
    %v337 = vld [vmem:[#allocation2 + $0x540] sm:$0xff]
    %v338 = vld [vmem:[#allocation2 + $0x548] sm:$0xff]
    %v339 = vld [vmem:[#allocation2 + $0x550] sm:$0xff]
    %v340 = vld [vmem:[#allocation2 + $0x558] sm:$0xff]
    %v341 = vld [vmem:[#allocation2 + $0x560] sm:$0xff]
    %v342 = vld [vmem:[#allocation2 + $0x568] sm:$0xff]
    %v343 = vld [vmem:[#allocation2 + $0x570] sm:$0xff]
    %v344 = vld [vmem:[#allocation2 + $0x578] sm:$0xff]
    %v345 = vld [vmem:[#allocation2 + $0x580] sm:$0xff]
    %v346 = vld [vmem:[#allocation2 + $0x588] sm:$0xff]
    %v347 = vld [vmem:[#allocation2 + $0x590] sm:$0xff]
    %v348 = vld [vmem:[#allocation2 + $0x598] sm:$0xff]
    %v349 = vld [vmem:[#allocation2 + $0x5a0] sm:$0xff]
    %v350 = vld [vmem:[#allocation2 + $0x5a8] sm:$0xff]
    %v351 = vld [vmem:[#allocation2 + $0x5b0] sm:$0xff]
    %v352 = vld [vmem:[#allocation2 + $0x5b8] sm:$0xff]
    %v353 = vld [vmem:[#allocation2 + $0x5c0] sm:$0xff]
    %v354 = vld [vmem:[#allocation2 + $0x5c8] sm:$0xff]
    %v355 = vld [vmem:[#allocation2 + $0x5d0] sm:$0xff]
    %v356 = vld [vmem:[#allocation2 + $0x5d8] sm:$0xff]
    %v357 = vld [vmem:[#allocation2 + $0x5e0] sm:$0xff]
    %v358 = vld [vmem:[#allocation2 + $0x5e8] sm:$0xff]
    %v359 = vld [vmem:[#allocation2 + $0x5f0] sm:$0xff]
    %v360 = vld [vmem:[#allocation2 + $0x5f8] sm:$0xff]
    %v361 = vld [vmem:[#allocation2 + $0x600] sm:$0xff]
    %v362 = vld [vmem:[#allocation2 + $0x608] sm:$0xff]
    %v363 = vld [vmem:[#allocation2 + $0x610] sm:$0xff]
    %v364 = vld [vmem:[#allocation2 + $0x618] sm:$0xff]
    %v365 = vld [vmem:[%s2] sm:$0xf]
    %v367 = vlaneseq
    %v368 = vshrl.u32 %v367, 7
    %v369 = vsub.s32 0, %v368
    %v370 = vrot.slane %v365, %v369
    %v371 = vlaneseq
    %v372 = vshrl.u32 %v371, 7
    %v373 = vsub.s32 1, %v372
    %v374 = vrot.slane %v365, %v373
    %v375 = vlaneseq
    %v376 = vshrl.u32 %v375, 7
    %v377 = vsub.s32 2, %v376
    %v378 = vrot.slane %v365, %v377
    %v379 = vlaneseq
    %v380 = vshrl.u32 %v379, 7
    %v381 = vsub.s32 3, %v380
    %v382 = vrot.slane %v365, %v381
    %v583 = vunpack.c.l.b16 %v169
    %v584 = vunpack.c.h.b16 %v169
    %v585 = vunpack.c.l.b16 %v170
    %v586 = vunpack.c.h.b16 %v170
    %v587 = vunpack.c.l.b16 %v171
    %v588 = vunpack.c.h.b16 %v171
    %v589 = vunpack.c.l.b16 %v172
    %v590 = vunpack.c.h.b16 %v172
    %v591 = vunpack.c.l.b16 %v173
    %v592 = vunpack.c.h.b16 %v173
    %v593 = vunpack.c.l.b16 %v174
    %v594 = vunpack.c.h.b16 %v174
    %v595 = vunpack.c.l.b16 %v175
    %v596 = vunpack.c.h.b16 %v175
    %v597 = vunpack.c.l.b16 %v176
    %v598 = vunpack.c.h.b16 %v176
    %v599 = vunpack.c.l.b16 %v177
    %v600 = vunpack.c.h.b16 %v177
    %v601 = vunpack.c.l.b16 %v178
    %v602 = vunpack.c.h.b16 %v178
    %v603 = vunpack.c.l.b16 %v179
    %v604 = vunpack.c.h.b16 %v179
    %v605 = vunpack.c.l.b16 %v180
    %v606 = vunpack.c.h.b16 %v180
    %v607 = vunpack.c.l.b16 %v181
    %v608 = vunpack.c.h.b16 %v181
    %v609 = vunpack.c.l.b16 %v182
    %v610 = vunpack.c.h.b16 %v182
    %v611 = vunpack.c.l.b16 %v183
    %v612 = vunpack.c.h.b16 %v183
    %v613 = vunpack.c.l.b16 %v184
    %v614 = vunpack.c.h.b16 %v184
    %v615 = vunpack.c.l.b16 %v185
    %v616 = vunpack.c.h.b16 %v185
    %v617 = vunpack.c.l.b16 %v186
    %v618 = vunpack.c.h.b16 %v186
    %v619 = vunpack.c.l.b16 %v187
    %v620 = vunpack.c.h.b16 %v187
    %v621 = vunpack.c.l.b16 %v188
    %v622 = vunpack.c.h.b16 %v188
    %v623 = vunpack.c.l.b16 %v189
    %v624 = vunpack.c.h.b16 %v189
    %v625 = vunpack.c.l.b16 %v190
    %v626 = vunpack.c.h.b16 %v190
    %v627 = vunpack.c.l.b16 %v191
    %v628 = vunpack.c.h.b16 %v191
    %v629 = vunpack.c.l.b16 %v192
    %v630 = vunpack.c.h.b16 %v192
    %v631 = vunpack.c.l.b16 %v193
    %v632 = vunpack.c.h.b16 %v193
    %v633 = vunpack.c.l.b16 %v194
    %v634 = vunpack.c.h.b16 %v194
    %v635 = vunpack.c.l.b16 %v195
    %v636 = vunpack.c.h.b16 %v195
    %v637 = vunpack.c.l.b16 %v196
    %v638 = vunpack.c.h.b16 %v196
    %v639 = vunpack.c.l.b16 %v197
    %v640 = vunpack.c.h.b16 %v197
    %v641 = vunpack.c.l.b16 %v198
    %v642 = vunpack.c.h.b16 %v198
    %v643 = vunpack.c.l.b16 %v199
    %v644 = vunpack.c.h.b16 %v199
    %v645 = vunpack.c.l.b16 %v200
    %v646 = vunpack.c.h.b16 %v200
    %v647 = vunpack.c.l.b16 %v201
    %v648 = vunpack.c.h.b16 %v201
    %v649 = vunpack.c.l.b16 %v202
    %v650 = vunpack.c.h.b16 %v202
    %v651 = vunpack.c.l.b16 %v203
    %v652 = vunpack.c.h.b16 %v203
    %v653 = vunpack.c.l.b16 %v204
    %v654 = vunpack.c.h.b16 %v204
    %v655 = vunpack.c.l.b16 %v205
    %v656 = vunpack.c.h.b16 %v205
    %v657 = vunpack.c.l.b16 %v206
    %v658 = vunpack.c.h.b16 %v206
    %v659 = vunpack.c.l.b16 %v207
    %v660 = vunpack.c.h.b16 %v207
    %v661 = vunpack.c.l.b16 %v208
    %v662 = vunpack.c.h.b16 %v208
    %v663 = vunpack.c.l.b16 %v209
    %v664 = vunpack.c.h.b16 %v209
    %v665 = vunpack.c.l.b16 %v210
    %v666 = vunpack.c.h.b16 %v210
    %v667 = vunpack.c.l.b16 %v211
    %v668 = vunpack.c.h.b16 %v211
    %v669 = vunpack.c.l.b16 %v212
    %v670 = vunpack.c.h.b16 %v212
    %v671 = vunpack.c.l.b16 %v213
    %v672 = vunpack.c.h.b16 %v213
    %v673 = vunpack.c.l.b16 %v214
    %v674 = vunpack.c.h.b16 %v214
    %v675 = vunpack.c.l.b16 %v215
    %v676 = vunpack.c.h.b16 %v215
    %v677 = vunpack.c.l.b16 %v216
    %v678 = vunpack.c.h.b16 %v216
    %v679 = vunpack.c.l.b16 %v217
    %v680 = vunpack.c.h.b16 %v217
    %v681 = vunpack.c.l.b16 %v218
    %v682 = vunpack.c.h.b16 %v218
    %v683 = vunpack.c.l.b16 %v219
    %v684 = vunpack.c.h.b16 %v219
    %v685 = vunpack.c.l.b16 %v220
    %v686 = vunpack.c.h.b16 %v220
    %v687 = vunpack.c.l.b16 %v221
    %v688 = vunpack.c.h.b16 %v221
    %v689 = vunpack.c.l.b16 %v222
    %v690 = vunpack.c.h.b16 %v222
    %v691 = vunpack.c.l.b16 %v223
    %v692 = vunpack.c.h.b16 %v223
    %v693 = vunpack.c.l.b16 %v224
    %v694 = vunpack.c.h.b16 %v224
    %v695 = vunpack.c.l.b16 %v225
    %v696 = vunpack.c.h.b16 %v225
    %v697 = vunpack.c.l.b16 %v226
    %v698 = vunpack.c.h.b16 %v226
    %v699 = vunpack.c.l.b16 %v227
    %v700 = vunpack.c.h.b16 %v227
    %v701 = vunpack.c.l.b16 %v228
    %v702 = vunpack.c.h.b16 %v228
    %v703 = vunpack.c.l.b16 %v229
    %v704 = vunpack.c.h.b16 %v229
    %v705 = vunpack.c.l.b16 %v230
    %v706 = vunpack.c.h.b16 %v230
    %v707 = vunpack.c.l.b16 %v231
    %v708 = vunpack.c.h.b16 %v231
    %v709 = vunpack.c.l.b16 %v232
    %v710 = vunpack.c.h.b16 %v232
    %v711 = vunpack.c.l.b16 %v233
    %v712 = vunpack.c.h.b16 %v233
    %v713 = vunpack.c.l.b16 %v234
    %v714 = vunpack.c.h.b16 %v234
    %v715 = vunpack.c.l.b16 %v235
    %v716 = vunpack.c.h.b16 %v235
    %v717 = vunpack.c.l.b16 %v236
    %v718 = vunpack.c.h.b16 %v236
    %v719 = vunpack.c.l.b16 %v237
    %v720 = vunpack.c.h.b16 %v237
    %v721 = vunpack.c.l.b16 %v238
    %v722 = vunpack.c.h.b16 %v238
    %v723 = vunpack.c.l.b16 %v239
    %v724 = vunpack.c.h.b16 %v239
    %v725 = vunpack.c.l.b16 %v240
    %v726 = vunpack.c.h.b16 %v240
    %v727 = vunpack.c.l.b16 %v241
    %v728 = vunpack.c.h.b16 %v241
    %v729 = vunpack.c.l.b16 %v242
    %v730 = vunpack.c.h.b16 %v242
    %v731 = vunpack.c.l.b16 %v243
    %v732 = vunpack.c.h.b16 %v243
    %v733 = vunpack.c.l.b16 %v244
    %v734 = vunpack.c.h.b16 %v244
    %v735 = vunpack.c.l.b16 %v245
    %v736 = vunpack.c.h.b16 %v245
    %v737 = vunpack.c.l.b16 %v246
    %v738 = vunpack.c.h.b16 %v246
    %v739 = vunpack.c.l.b16 %v247
    %v740 = vunpack.c.h.b16 %v247
    %v741 = vunpack.c.l.b16 %v248
    %v742 = vunpack.c.h.b16 %v248
    %v743 = vunpack.c.l.b16 %v249
    %v744 = vunpack.c.h.b16 %v249
    %v745 = vunpack.c.l.b16 %v250
    %v746 = vunpack.c.h.b16 %v250
    %v747 = vunpack.c.l.b16 %v251
    %v748 = vunpack.c.h.b16 %v251
    %v749 = vunpack.c.l.b16 %v252
    %v750 = vunpack.c.h.b16 %v252
    %v751 = vunpack.c.l.b16 %v253
    %v752 = vunpack.c.h.b16 %v253
    %v753 = vunpack.c.l.b16 %v254
    %v754 = vunpack.c.h.b16 %v254
    %v755 = vunpack.c.l.b16 %v255
    %v756 = vunpack.c.h.b16 %v255
    %v757 = vunpack.c.l.b16 %v256
    %v758 = vunpack.c.h.b16 %v256
    %v759 = vunpack.c.l.b16 %v257
    %v760 = vunpack.c.h.b16 %v257
    %v761 = vunpack.c.l.b16 %v258
    %v762 = vunpack.c.h.b16 %v258
    %v763 = vunpack.c.l.b16 %v259
    %v764 = vunpack.c.h.b16 %v259
    %v765 = vunpack.c.l.b16 %v260
    %v766 = vunpack.c.h.b16 %v260
    %v767 = vunpack.c.l.b16 %v261
    %v768 = vunpack.c.h.b16 %v261
    %v769 = vunpack.c.l.b16 %v262
    %v770 = vunpack.c.h.b16 %v262
    %v771 = vunpack.c.l.b16 %v263
    %v772 = vunpack.c.h.b16 %v263
    %v773 = vunpack.c.l.b16 %v264
    %v774 = vunpack.c.h.b16 %v264
    %v775 = vunpack.c.l.b16 %v265
    %v776 = vunpack.c.h.b16 %v265
    %v777 = vunpack.c.l.b16 %v266
    %v778 = vunpack.c.h.b16 %v266
    %v779 = vunpack.c.l.b16 %v267
    %v780 = vunpack.c.h.b16 %v267
    %v781 = vunpack.c.l.b16 %v268
    %v782 = vunpack.c.h.b16 %v268
    %v783 = vunpack.c.l.b16 %v269
    %v784 = vunpack.c.h.b16 %v269
    %v785 = vunpack.c.l.b16 %v270
    %v786 = vunpack.c.h.b16 %v270
    %v787 = vunpack.c.l.b16 %v271
    %v788 = vunpack.c.h.b16 %v271
    %v789 = vunpack.c.l.b16 %v272
    %v790 = vunpack.c.h.b16 %v272
    %v791 = vunpack.c.l.b16 %v273
    %v792 = vunpack.c.h.b16 %v273
    %v793 = vunpack.c.l.b16 %v274
    %v794 = vunpack.c.h.b16 %v274
    %v795 = vunpack.c.l.b16 %v275
    %v796 = vunpack.c.h.b16 %v275
    %v797 = vunpack.c.l.b16 %v276
    %v798 = vunpack.c.h.b16 %v276
    %v799 = vunpack.c.l.b16 %v277
    %v800 = vunpack.c.h.b16 %v277
    %v801 = vunpack.c.l.b16 %v278
    %v802 = vunpack.c.h.b16 %v278
    %v803 = vunpack.c.l.b16 %v279
    %v804 = vunpack.c.h.b16 %v279
    %v805 = vunpack.c.l.b16 %v280
    %v806 = vunpack.c.h.b16 %v280
    %v807 = vunpack.c.l.b16 %v281
    %v808 = vunpack.c.h.b16 %v281
    %v809 = vunpack.c.l.b16 %v282
    %v810 = vunpack.c.h.b16 %v282
    %v811 = vunpack.c.l.b16 %v283
    %v812 = vunpack.c.h.b16 %v283
    %v813 = vunpack.c.l.b16 %v284
    %v814 = vunpack.c.h.b16 %v284
    %v815 = vunpack.c.l.b16 %v285
    %v816 = vunpack.c.h.b16 %v285
    %v817 = vunpack.c.l.b16 %v286
    %v818 = vunpack.c.h.b16 %v286
    %v819 = vunpack.c.l.b16 %v287
    %v820 = vunpack.c.h.b16 %v287
    %v821 = vunpack.c.l.b16 %v288
    %v822 = vunpack.c.h.b16 %v288
    %v823 = vunpack.c.l.b16 %v289
    %v824 = vunpack.c.h.b16 %v289
    %v825 = vunpack.c.l.b16 %v290
    %v826 = vunpack.c.h.b16 %v290
    %v827 = vunpack.c.l.b16 %v291
    %v828 = vunpack.c.h.b16 %v291
    %v829 = vunpack.c.l.b16 %v292
    %v830 = vunpack.c.h.b16 %v292
    %v831 = vunpack.c.l.b16 %v293
    %v832 = vunpack.c.h.b16 %v293
    %v833 = vunpack.c.l.b16 %v294
    %v834 = vunpack.c.h.b16 %v294
    %v835 = vunpack.c.l.b16 %v295
    %v836 = vunpack.c.h.b16 %v295
    %v837 = vunpack.c.l.b16 %v296
    %v838 = vunpack.c.h.b16 %v296
    %v839 = vunpack.c.l.b16 %v297
    %v840 = vunpack.c.h.b16 %v297
    %v841 = vunpack.c.l.b16 %v298
    %v842 = vunpack.c.h.b16 %v298
    %v843 = vunpack.c.l.b16 %v299
    %v844 = vunpack.c.h.b16 %v299
    %v845 = vunpack.c.l.b16 %v300
    %v846 = vunpack.c.h.b16 %v300
    %v847 = vunpack.c.l.b16 %v301
    %v848 = vunpack.c.h.b16 %v301
    %v849 = vunpack.c.l.b16 %v302
    %v850 = vunpack.c.h.b16 %v302
    %v851 = vunpack.c.l.b16 %v303
    %v852 = vunpack.c.h.b16 %v303
    %v853 = vunpack.c.l.b16 %v304
    %v854 = vunpack.c.h.b16 %v304
    %v855 = vunpack.c.l.b16 %v305
    %v856 = vunpack.c.h.b16 %v305
    %v857 = vunpack.c.l.b16 %v306
    %v858 = vunpack.c.h.b16 %v306
    %v859 = vunpack.c.l.b16 %v307
    %v860 = vunpack.c.h.b16 %v307
    %v861 = vunpack.c.l.b16 %v308
    %v862 = vunpack.c.h.b16 %v308
    %v863 = vunpack.c.l.b16 %v309
    %v864 = vunpack.c.h.b16 %v309
    %v865 = vunpack.c.l.b16 %v310
    %v866 = vunpack.c.h.b16 %v310
    %v867 = vunpack.c.l.b16 %v311
    %v868 = vunpack.c.h.b16 %v311
    %v869 = vunpack.c.l.b16 %v312
    %v870 = vunpack.c.h.b16 %v312
    %v871 = vunpack.c.l.b16 %v313
    %v872 = vunpack.c.h.b16 %v313
    %v873 = vunpack.c.l.b16 %v314
    %v874 = vunpack.c.h.b16 %v314
    %v875 = vunpack.c.l.b16 %v315
    %v876 = vunpack.c.h.b16 %v315
    %v877 = vunpack.c.l.b16 %v316
    %v878 = vunpack.c.h.b16 %v316
    %v879 = vunpack.c.l.b16 %v317
    %v880 = vunpack.c.h.b16 %v317
    %v881 = vunpack.c.l.b16 %v318
    %v882 = vunpack.c.h.b16 %v318
    %v883 = vunpack.c.l.b16 %v319
    %v884 = vunpack.c.h.b16 %v319
    %v885 = vunpack.c.l.b16 %v320
    %v886 = vunpack.c.h.b16 %v320
    %v887 = vunpack.c.l.b16 %v321
    %v888 = vunpack.c.h.b16 %v321
    %v889 = vunpack.c.l.b16 %v322
    %v890 = vunpack.c.h.b16 %v322
    %v891 = vunpack.c.l.b16 %v323
    %v892 = vunpack.c.h.b16 %v323
    %v893 = vunpack.c.l.b16 %v324
    %v894 = vunpack.c.h.b16 %v324
    %v895 = vunpack.c.l.b16 %v325
    %v896 = vunpack.c.h.b16 %v325
    %v897 = vunpack.c.l.b16 %v326
    %v898 = vunpack.c.h.b16 %v326
    %v899 = vunpack.c.l.b16 %v327
    %v900 = vunpack.c.h.b16 %v327
    %v901 = vunpack.c.l.b16 %v328
    %v902 = vunpack.c.h.b16 %v328
    %v903 = vunpack.c.l.b16 %v329
    %v904 = vunpack.c.h.b16 %v329
    %v905 = vunpack.c.l.b16 %v330
    %v906 = vunpack.c.h.b16 %v330
    %v907 = vunpack.c.l.b16 %v331
    %v908 = vunpack.c.h.b16 %v331
    %v909 = vunpack.c.l.b16 %v332
    %v910 = vunpack.c.h.b16 %v332
    %v911 = vunpack.c.l.b16 %v333
    %v912 = vunpack.c.h.b16 %v333
    %v913 = vunpack.c.l.b16 %v334
    %v914 = vunpack.c.h.b16 %v334
    %v915 = vunpack.c.l.b16 %v335
    %v916 = vunpack.c.h.b16 %v335
    %v917 = vunpack.c.l.b16 %v336
    %v918 = vunpack.c.h.b16 %v336
    %v919 = vunpack.c.l.b16 %v337
    %v920 = vunpack.c.h.b16 %v337
    %v921 = vunpack.c.l.b16 %v338
    %v922 = vunpack.c.h.b16 %v338
    %v923 = vunpack.c.l.b16 %v339
    %v924 = vunpack.c.h.b16 %v339
    %v925 = vunpack.c.l.b16 %v340
    %v926 = vunpack.c.h.b16 %v340
    %v927 = vunpack.c.l.b16 %v341
    %v928 = vunpack.c.h.b16 %v341
    %v929 = vunpack.c.l.b16 %v342
    %v930 = vunpack.c.h.b16 %v342
    %v931 = vunpack.c.l.b16 %v343
    %v932 = vunpack.c.h.b16 %v343
    %v933 = vunpack.c.l.b16 %v344
    %v934 = vunpack.c.h.b16 %v344
    %v935 = vunpack.c.l.b16 %v345
    %v936 = vunpack.c.h.b16 %v345
    %v937 = vunpack.c.l.b16 %v346
    %v938 = vunpack.c.h.b16 %v346
    %v939 = vunpack.c.l.b16 %v347
    %v940 = vunpack.c.h.b16 %v347
    %v941 = vunpack.c.l.b16 %v348
    %v942 = vunpack.c.h.b16 %v348
    %v943 = vunpack.c.l.b16 %v349
    %v944 = vunpack.c.h.b16 %v349
    %v945 = vunpack.c.l.b16 %v350
    %v946 = vunpack.c.h.b16 %v350
    %v947 = vunpack.c.l.b16 %v351
    %v948 = vunpack.c.h.b16 %v351
    %v949 = vunpack.c.l.b16 %v352
    %v950 = vunpack.c.h.b16 %v352
    %v951 = vunpack.c.l.b16 %v353
    %v952 = vunpack.c.h.b16 %v353
    %v953 = vunpack.c.l.b16 %v354
    %v954 = vunpack.c.h.b16 %v354
    %v955 = vunpack.c.l.b16 %v355
    %v956 = vunpack.c.h.b16 %v355
    %v957 = vunpack.c.l.b16 %v356
    %v958 = vunpack.c.h.b16 %v356
    %v959 = vunpack.c.l.b16 %v357
    %v960 = vunpack.c.h.b16 %v357
    %v961 = vunpack.c.l.b16 %v358
    %v962 = vunpack.c.h.b16 %v358
    %v963 = vunpack.c.l.b16 %v359
    %v964 = vunpack.c.h.b16 %v359
    %v965 = vunpack.c.l.b16 %v360
    %v966 = vunpack.c.h.b16 %v360
    %v967 = vunpack.c.l.b16 %v361
    %v968 = vunpack.c.h.b16 %v361
    %v969 = vunpack.c.l.b16 %v362
    %v970 = vunpack.c.h.b16 %v362
    %v971 = vunpack.c.l.b16 %v363
    %v972 = vunpack.c.h.b16 %v363
    %v973 = vunpack.c.l.b16 %v364
    %v974 = vunpack.c.h.b16 %v364
    %v975 = vpack.c.b16 %v587, %v583
    %v976 = vpack.c.b16 %v588, %v584
    %v977 = vpack.c.b16 %v589, %v585
    %v978 = vpack.c.b16 %v590, %v586
    %v979 = vpack.c.b16 %v595, %v591
    %v980 = vpack.c.b16 %v596, %v592
    %v981 = vpack.c.b16 %v597, %v593
    %v982 = vpack.c.b16 %v598, %v594
    %v983 = vpack.c.b16 %v603, %v599
    %v984 = vpack.c.b16 %v604, %v600
    %v985 = vpack.c.b16 %v605, %v601
    %v986 = vpack.c.b16 %v606, %v602
    %v987 = vpack.c.b16 %v611, %v607
    %v988 = vpack.c.b16 %v612, %v608
    %v989 = vpack.c.b16 %v613, %v609
    %v990 = vpack.c.b16 %v614, %v610
    %v991 = vpack.c.b16 %v619, %v615
    %v992 = vpack.c.b16 %v620, %v616
    %v993 = vpack.c.b16 %v621, %v617
    %v994 = vpack.c.b16 %v622, %v618
    %v995 = vpack.c.b16 %v627, %v623
    %v996 = vpack.c.b16 %v628, %v624
    %v997 = vpack.c.b16 %v629, %v625
    %v998 = vpack.c.b16 %v630, %v626
    %v999 = vpack.c.b16 %v635, %v631
    %v1000 = vpack.c.b16 %v636, %v632
    %v1001 = vpack.c.b16 %v637, %v633
    %v1002 = vpack.c.b16 %v638, %v634
    %v1003 = vpack.c.b16 %v643, %v639
    %v1004 = vpack.c.b16 %v644, %v640
    %v1005 = vpack.c.b16 %v645, %v641
    %v1006 = vpack.c.b16 %v646, %v642
    %v1007 = vpack.c.b16 %v651, %v647
    %v1008 = vpack.c.b16 %v652, %v648
    %v1009 = vpack.c.b16 %v653, %v649
    %v1010 = vpack.c.b16 %v654, %v650
    %v1011 = vpack.c.b16 %v659, %v655
    %v1012 = vpack.c.b16 %v660, %v656
    %v1013 = vpack.c.b16 %v661, %v657
    %v1014 = vpack.c.b16 %v662, %v658
    %v1015 = vpack.c.b16 %v667, %v663
    %v1016 = vpack.c.b16 %v668, %v664
    %v1017 = vpack.c.b16 %v669, %v665
    %v1018 = vpack.c.b16 %v670, %v666
    %v1019 = vpack.c.b16 %v675, %v671
    %v1020 = vpack.c.b16 %v676, %v672
    %v1021 = vpack.c.b16 %v677, %v673
    %v1022 = vpack.c.b16 %v678, %v674
    %v1023 = vpack.c.b16 %v683, %v679
    %v1024 = vpack.c.b16 %v684, %v680
    %v1025 = vpack.c.b16 %v685, %v681
    %v1026 = vpack.c.b16 %v686, %v682
    %v1027 = vpack.c.b16 %v691, %v687
    %v1028 = vpack.c.b16 %v692, %v688
    %v1029 = vpack.c.b16 %v693, %v689
    %v1030 = vpack.c.b16 %v694, %v690
    %v1031 = vpack.c.b16 %v699, %v695
    %v1032 = vpack.c.b16 %v700, %v696
    %v1033 = vpack.c.b16 %v701, %v697
    %v1034 = vpack.c.b16 %v702, %v698
    %v1035 = vpack.c.b16 %v707, %v703
    %v1036 = vpack.c.b16 %v708, %v704
    %v1037 = vpack.c.b16 %v709, %v705
    %v1038 = vpack.c.b16 %v710, %v706
    %v1039 = vpack.c.b16 %v715, %v711
    %v1040 = vpack.c.b16 %v716, %v712
    %v1041 = vpack.c.b16 %v717, %v713
    %v1042 = vpack.c.b16 %v718, %v714
    %v1043 = vpack.c.b16 %v723, %v719
    %v1044 = vpack.c.b16 %v724, %v720
    %v1045 = vpack.c.b16 %v725, %v721
    %v1046 = vpack.c.b16 %v726, %v722
    %v1047 = vpack.c.b16 %v731, %v727
    %v1048 = vpack.c.b16 %v732, %v728
    %v1049 = vpack.c.b16 %v733, %v729
    %v1050 = vpack.c.b16 %v734, %v730
    %v1051 = vpack.c.b16 %v739, %v735
    %v1052 = vpack.c.b16 %v740, %v736
    %v1053 = vpack.c.b16 %v741, %v737
    %v1054 = vpack.c.b16 %v742, %v738
    %v1055 = vpack.c.b16 %v747, %v743
    %v1056 = vpack.c.b16 %v748, %v744
    %v1057 = vpack.c.b16 %v749, %v745
    %v1058 = vpack.c.b16 %v750, %v746
    %v1059 = vpack.c.b16 %v755, %v751
    %v1060 = vpack.c.b16 %v756, %v752
    %v1061 = vpack.c.b16 %v757, %v753
    %v1062 = vpack.c.b16 %v758, %v754
    %v1063 = vpack.c.b16 %v763, %v759
    %v1064 = vpack.c.b16 %v764, %v760
    %v1065 = vpack.c.b16 %v765, %v761
    %v1066 = vpack.c.b16 %v766, %v762
    %v1067 = vpack.c.b16 %v771, %v767
    %v1068 = vpack.c.b16 %v772, %v768
    %v1069 = vpack.c.b16 %v773, %v769
    %v1070 = vpack.c.b16 %v774, %v770
    %v1071 = vpack.c.b16 %v779, %v775
    %v1072 = vpack.c.b16 %v780, %v776
    %v1073 = vpack.c.b16 %v781, %v777
    %v1074 = vpack.c.b16 %v782, %v778
    %v1075 = vpack.c.b16 %v787, %v783
    %v1076 = vpack.c.b16 %v788, %v784
    %v1077 = vpack.c.b16 %v789, %v785
    %v1078 = vpack.c.b16 %v790, %v786
    %v1079 = vpack.c.b16 %v795, %v791
    %v1080 = vpack.c.b16 %v796, %v792
    %v1081 = vpack.c.b16 %v797, %v793
    %v1082 = vpack.c.b16 %v798, %v794
    %v1083 = vpack.c.b16 %v803, %v799
    %v1084 = vpack.c.b16 %v804, %v800
    %v1085 = vpack.c.b16 %v805, %v801
    %v1086 = vpack.c.b16 %v806, %v802
    %v1087 = vpack.c.b16 %v811, %v807
    %v1088 = vpack.c.b16 %v812, %v808
    %v1089 = vpack.c.b16 %v813, %v809
    %v1090 = vpack.c.b16 %v814, %v810
    %v1091 = vpack.c.b16 %v819, %v815
    %v1092 = vpack.c.b16 %v820, %v816
    %v1093 = vpack.c.b16 %v821, %v817
    %v1094 = vpack.c.b16 %v822, %v818
    %v1095 = vpack.c.b16 %v827, %v823
    %v1096 = vpack.c.b16 %v828, %v824
    %v1097 = vpack.c.b16 %v829, %v825
    %v1098 = vpack.c.b16 %v830, %v826
    %v1099 = vpack.c.b16 %v835, %v831
    %v1100 = vpack.c.b16 %v836, %v832
    %v1101 = vpack.c.b16 %v837, %v833
    %v1102 = vpack.c.b16 %v838, %v834
    %v1103 = vpack.c.b16 %v843, %v839
    %v1104 = vpack.c.b16 %v844, %v840
    %v1105 = vpack.c.b16 %v845, %v841
    %v1106 = vpack.c.b16 %v846, %v842
    %v1107 = vpack.c.b16 %v851, %v847
    %v1108 = vpack.c.b16 %v852, %v848
    %v1109 = vpack.c.b16 %v853, %v849
    %v1110 = vpack.c.b16 %v854, %v850
    %v1111 = vpack.c.b16 %v859, %v855
    %v1112 = vpack.c.b16 %v860, %v856
    %v1113 = vpack.c.b16 %v861, %v857
    %v1114 = vpack.c.b16 %v862, %v858
    %v1115 = vpack.c.b16 %v867, %v863
    %v1116 = vpack.c.b16 %v868, %v864
    %v1117 = vpack.c.b16 %v869, %v865
    %v1118 = vpack.c.b16 %v870, %v866
    %v1119 = vpack.c.b16 %v875, %v871
    %v1120 = vpack.c.b16 %v876, %v872
    %v1121 = vpack.c.b16 %v877, %v873
    %v1122 = vpack.c.b16 %v878, %v874
    %v1123 = vpack.c.b16 %v883, %v879
    %v1124 = vpack.c.b16 %v884, %v880
    %v1125 = vpack.c.b16 %v885, %v881
    %v1126 = vpack.c.b16 %v886, %v882
    %v1127 = vpack.c.b16 %v891, %v887
    %v1128 = vpack.c.b16 %v892, %v888
    %v1129 = vpack.c.b16 %v893, %v889
    %v1130 = vpack.c.b16 %v894, %v890
    %v1131 = vpack.c.b16 %v899, %v895
    %v1132 = vpack.c.b16 %v900, %v896
    %v1133 = vpack.c.b16 %v901, %v897
    %v1134 = vpack.c.b16 %v902, %v898
    %v1135 = vpack.c.b16 %v907, %v903
    %v1136 = vpack.c.b16 %v908, %v904
    %v1137 = vpack.c.b16 %v909, %v905
    %v1138 = vpack.c.b16 %v910, %v906
    %v1139 = vpack.c.b16 %v915, %v911
    %v1140 = vpack.c.b16 %v916, %v912
    %v1141 = vpack.c.b16 %v917, %v913
    %v1142 = vpack.c.b16 %v918, %v914
    %v1143 = vpack.c.b16 %v923, %v919
    %v1144 = vpack.c.b16 %v924, %v920
    %v1145 = vpack.c.b16 %v925, %v921
    %v1146 = vpack.c.b16 %v926, %v922
    %v1147 = vpack.c.b16 %v931, %v927
    %v1148 = vpack.c.b16 %v932, %v928
    %v1149 = vpack.c.b16 %v933, %v929
    %v1150 = vpack.c.b16 %v934, %v930
    %v1151 = vpack.c.b16 %v939, %v935
    %v1152 = vpack.c.b16 %v940, %v936
    %v1153 = vpack.c.b16 %v941, %v937
    %v1154 = vpack.c.b16 %v942, %v938
    %v1155 = vpack.c.b16 %v947, %v943
    %v1156 = vpack.c.b16 %v948, %v944
    %v1157 = vpack.c.b16 %v949, %v945
    %v1158 = vpack.c.b16 %v950, %v946
    %v1159 = vpack.c.b16 %v955, %v951
    %v1160 = vpack.c.b16 %v956, %v952
    %v1161 = vpack.c.b16 %v957, %v953
    %v1162 = vpack.c.b16 %v958, %v954
    %v1163 = vpack.c.b16 %v963, %v959
    %v1164 = vpack.c.b16 %v964, %v960
    %v1165 = vpack.c.b16 %v965, %v961
    %v1166 = vpack.c.b16 %v966, %v962
    %v1167 = vpack.c.b16 %v971, %v967
    %v1168 = vpack.c.b16 %v972, %v968
    %v1169 = vpack.c.b16 %v973, %v969
    %v1170 = vpack.c.b16 %v974, %v970
    %vm1367 = vcmask 130048
    %v1369 = vsel %vm1367, %v168, 0
    %1371 = vmatprep.subr.bf16.mxu0 %v976
    %1372 = vmatpush1.bf16.msra.mxu0 %v975
    %1373 = vmatprep.subr.bf16.mxu0 %v980
    %1374 = vmatpush1.bf16.msra.mxu0 %v979
    %1375 = vmatprep.subr.bf16.mxu0 %v984
    %1376 = vmatpush1.bf16.msra.mxu0 %v983
    %1377 = vmatprep.subr.bf16.mxu0 %v988
    %1378 = vmatpush1.bf16.msra.mxu0 %v987
    %1379 = vmatprep.subr.bf16.mxu0 %v992
    %1380 = vmatpush1.bf16.msra.mxu0 %v991
    %1381 = vmatprep.subr.bf16.mxu0 %v996
    %1382 = vmatpush1.bf16.msra.mxu0 %v995
    %1383 = vmatprep.subr.bf16.mxu0 %v1000
    %1384 = vmatpush1.bf16.msra.mxu0 %v999
    %1385 = vmatprep.subr.bf16.mxu0 %v1004
    %1386 = vmatpush1.bf16.msra.mxu0 %v1003
    %1387 = vmatprep.subr.bf16.mxu0 %v1008
    %1388 = vmatpush1.bf16.msra.mxu0 %v1007
    %1389 = vmatprep.subr.bf16.mxu0 %v1012
    %1390 = vmatpush1.bf16.msra.mxu0 %v1011
    %1391 = vmatprep.subr.bf16.mxu0 %v1016
    %1392 = vmatpush1.bf16.msra.mxu0 %v1015
    %1393 = vmatprep.subr.bf16.mxu0 %v1020
    %1394 = vmatpush1.bf16.msra.mxu0 %v1019
    %1395 = vmatprep.subr.bf16.mxu0 %v1024
    %1396 = vmatpush1.bf16.msra.mxu0 %v1023
    %1397 = vmatprep.subr.bf16.mxu0 %v1028
    %1398 = vmatpush1.bf16.msra.mxu0 %v1027
    %1399 = vmatprep.subr.bf16.mxu0 %v1032
    %1400 = vmatpush1.bf16.msra.mxu0 %v1031
    %1401 = vmatprep.subr.bf16.mxu0 %v1036
    %1402 = vmatpush1.bf16.msra.mxu0 %v1035
    %1403 = vmatprep.mubr.bf16.mxu0 %v163
    %1404 = vmatmul.mubr.bf16.gmra.mrb[0].mxu0 %v162
    %v1405 = vpop.f32.mrb[0].mxu0
    %v1406 = vadd.f32 %v370, %v1405
    %v1407 = vpop.f32.mrb[0].mxu0
    %v1408 = vadd.f32 %v374, %v1407
    %v1409 = vpop.f32.mrb[0].mxu0
    %v1410 = vpop.f32.mrb[0].mxu0
    %1411 = vdwg.mxu0
    %1412 = vmatprep.subr.bf16.mxu0 %v1040
    %1413 = vmatpush1.bf16.msra.mxu0 %v1039
    %1414 = vmatprep.subr.bf16.mxu0 %v1044
    %1415 = vmatpush1.bf16.msra.mxu0 %v1043
    %1416 = vmatprep.subr.bf16.mxu0 %v1048
    %1417 = vmatpush1.bf16.msra.mxu0 %v1047
    %1418 = vmatprep.subr.bf16.mxu0 %v1052
    %1419 = vmatpush1.bf16.msra.mxu0 %v1051
    %1420 = vmatprep.subr.bf16.mxu0 %v1056
    %1421 = vmatpush1.bf16.msra.mxu0 %v1055
    %1422 = vmatprep.subr.bf16.mxu0 %v1060
    %1423 = vmatpush1.bf16.msra.mxu0 %v1059
    %1424 = vmatprep.subr.bf16.mxu0 %v1064
    %1425 = vmatpush1.bf16.msra.mxu0 %v1063
    %1426 = vmatprep.subr.bf16.mxu0 %v1068
    %1427 = vmatpush1.bf16.msra.mxu0 %v1067
    %1428 = vmatprep.subr.bf16.mxu0 %v1072
    %1429 = vmatpush1.bf16.msra.mxu0 %v1071
    %1430 = vmatprep.subr.bf16.mxu0 %v1076
    %1431 = vmatpush1.bf16.msra.mxu0 %v1075
    %1432 = vmatprep.subr.bf16.mxu0 %v1080
    %1433 = vmatpush1.bf16.msra.mxu0 %v1079
    %1434 = vmatprep.subr.bf16.mxu0 %v1084
    %1435 = vmatpush1.bf16.msra.mxu0 %v1083
    %1436 = vmatprep.subr.bf16.mxu0 %v1088
    %1437 = vmatpush1.bf16.msra.mxu0 %v1087
    %1438 = vmatprep.subr.bf16.mxu0 %v1092
    %1439 = vmatpush1.bf16.msra.mxu0 %v1091
    %1440 = vmatprep.subr.bf16.mxu0 %v1096
    %1441 = vmatpush1.bf16.msra.mxu0 %v1095
    %1442 = vmatprep.subr.bf16.mxu0 %v1100
    %1443 = vmatpush1.bf16.msra.mxu0 %v1099
    %1444 = vmatprep.mubr.bf16.mxu0 %v165
    %1445 = vmatmul.mubr.bf16.gmra.mrb[0].mxu0 %v164
    %v1446 = vpop.f32.mrb[0].mxu0
    %v1447 = vadd.f32 %v1406, %v1446
    %v1448 = vpop.f32.mrb[0].mxu0
    %v1449 = vadd.f32 %v1408, %v1448
    %v1450 = vpop.f32.mrb[0].mxu0
    %v1451 = vpop.f32.mrb[0].mxu0
    %1452 = vdwg.mxu0
    %1453 = vmatprep.subr.bf16.mxu0 %v1104
    %1454 = vmatpush1.bf16.msra.mxu0 %v1103
    %1455 = vmatprep.subr.bf16.mxu0 %v1108
    %1456 = vmatpush1.bf16.msra.mxu0 %v1107
    %1457 = vmatprep.subr.bf16.mxu0 %v1112
    %1458 = vmatpush1.bf16.msra.mxu0 %v1111
    %1459 = vmatprep.subr.bf16.mxu0 %v1116
    %1460 = vmatpush1.bf16.msra.mxu0 %v1115
    %1461 = vmatprep.subr.bf16.mxu0 %v1120
    %1462 = vmatpush1.bf16.msra.mxu0 %v1119
    %1463 = vmatprep.subr.bf16.mxu0 %v1124
    %1464 = vmatpush1.bf16.msra.mxu0 %v1123
    %1465 = vmatprep.subr.bf16.mxu0 %v1128
    %1466 = vmatpush1.bf16.msra.mxu0 %v1127
    %1467 = vmatprep.subr.bf16.mxu0 %v1132
    %1468 = vmatpush1.bf16.msra.mxu0 %v1131
    %1469 = vmatprep.subr.bf16.mxu0 %v1136
    %1470 = vmatpush1.bf16.msra.mxu0 %v1135
    %1471 = vmatprep.subr.bf16.mxu0 %v1140
    %1472 = vmatpush1.bf16.msra.mxu0 %v1139
    %1473 = vmatprep.subr.bf16.mxu0 %v1144
    %1474 = vmatpush1.bf16.msra.mxu0 %v1143
    %1475 = vmatprep.subr.bf16.mxu0 %v1148
    %1476 = vmatpush1.bf16.msra.mxu0 %v1147
    %1477 = vmatprep.subr.bf16.mxu0 %v1152
    %1478 = vmatpush1.bf16.msra.mxu0 %v1151
    %1479 = vmatprep.subr.bf16.mxu0 %v1156
    %1480 = vmatpush1.bf16.msra.mxu0 %v1155
    %1481 = vmatprep.subr.bf16.mxu0 %v1160
    %1482 = vmatpush1.bf16.msra.mxu0 %v1159
    %1483 = vmatprep.subr.bf16.mxu0 %v1164
    %1484 = vmatpush1.bf16.msra.mxu0 %v1163
    %1485 = vmatprep.mubr.bf16.mxu0 %v167
    %1486 = vmatmul.mubr.bf16.gmra.mrb[0].mxu0 %v166
    %v1487 = vpop.f32.mrb[0].mxu0
    %v1488 = vadd.f32 %v1447, %v1487
    %v1489 = vpop.f32.mrb[0].mxu0
    %v1490 = vadd.f32 %v1449, %v1489
    %v1491 = vpop.f32.mrb[0].mxu0
    %v1492 = vpop.f32.mrb[0].mxu0
    %1493 = vdwg.mxu0
    %1494 = vmatprep.subr.bf16.mxu0 %v1168
    %1495 = vmatpush1.bf16.msra.mxu0 %v1167
    %1496 = vmatprep.subr.bf16.mxu0 0
    %1497 = vmatpush1.bf16.msra.mxu0 0
    %1498 = vmatprep.subr.bf16.mxu0 0
    %1499 = vmatpush1.bf16.msra.mxu0 0
    %1500 = vmatprep.subr.bf16.mxu0 0
    %1501 = vmatpush1.bf16.msra.mxu0 0
    %1502 = vmatprep.subr.bf16.mxu0 0
    %1503 = vmatpush1.bf16.msra.mxu0 0
    %1504 = vmatprep.subr.bf16.mxu0 0
    %1505 = vmatpush1.bf16.msra.mxu0 0
    %1506 = vmatprep.subr.bf16.mxu0 0
    %1507 = vmatpush1.bf16.msra.mxu0 0
    %1508 = vmatprep.subr.bf16.mxu0 0
    %1509 = vmatpush1.bf16.msra.mxu0 0
    %1510 = vmatprep.subr.bf16.mxu0 0
    %1511 = vmatpush1.bf16.msra.mxu0 0
    %1512 = vmatprep.subr.bf16.mxu0 0
    %1513 = vmatpush1.bf16.msra.mxu0 0
    %1514 = vmatprep.subr.bf16.mxu0 0
    %1515 = vmatpush1.bf16.msra.mxu0 0
    %1516 = vmatprep.subr.bf16.mxu0 0
    %1517 = vmatpush1.bf16.msra.mxu0 0
    %1518 = vmatprep.subr.bf16.mxu0 0
    %1519 = vmatpush1.bf16.msra.mxu0 0
    %1520 = vmatprep.subr.bf16.mxu0 0
    %1521 = vmatpush1.bf16.msra.mxu0 0
    %1522 = vmatprep.subr.bf16.mxu0 0
    %1523 = vmatpush1.bf16.msra.mxu0 0
    %1524 = vmatprep.subr.bf16.mxu0 0
    %1525 = vmatpush1.bf16.msra.mxu0 0
    %1526 = vmatprep.mubr.bf16.mxu0 0
    %1527 = vmatmul.mubr.bf16.gmra.mrb[0].mxu0 %v1369
    %v1528 = vpop.f32.mrb[0].mxu0
    %v1529 = vadd.f32 %v1488, %v1528
    %v1530 = vpop.f32.mrb[0].mxu0
    %v1531 = vadd.f32 %v1490, %v1530
    %v1532 = vpop.f32.mrb[0].mxu0
    %v1533 = vpop.f32.mrb[0].mxu0
    %1534 = vdwg.mxu0
    %1535 = vmatprep.subr.bf16.mxu0 %v978
    %1536 = vmatpush1.bf16.msra.mxu0 %v977
    %1537 = vmatprep.subr.bf16.mxu0 %v982
    %1538 = vmatpush1.bf16.msra.mxu0 %v981
    %1539 = vmatprep.subr.bf16.mxu0 %v986
    %1540 = vmatpush1.bf16.msra.mxu0 %v985
    %1541 = vmatprep.subr.bf16.mxu0 %v990
    %1542 = vmatpush1.bf16.msra.mxu0 %v989
    %1543 = vmatprep.subr.bf16.mxu0 %v994
    %1544 = vmatpush1.bf16.msra.mxu0 %v993
    %1545 = vmatprep.subr.bf16.mxu0 %v998
    %1546 = vmatpush1.bf16.msra.mxu0 %v997
    %1547 = vmatprep.subr.bf16.mxu0 %v1002
    %1548 = vmatpush1.bf16.msra.mxu0 %v1001
    %1549 = vmatprep.subr.bf16.mxu0 %v1006
    %1550 = vmatpush1.bf16.msra.mxu0 %v1005
    %1551 = vmatprep.subr.bf16.mxu0 %v1010
    %1552 = vmatpush1.bf16.msra.mxu0 %v1009
    %1553 = vmatprep.subr.bf16.mxu0 %v1014
    %1554 = vmatpush1.bf16.msra.mxu0 %v1013
    %1555 = vmatprep.subr.bf16.mxu0 %v1018
    %1556 = vmatpush1.bf16.msra.mxu0 %v1017
    %1557 = vmatprep.subr.bf16.mxu0 %v1022
    %1558 = vmatpush1.bf16.msra.mxu0 %v1021
    %1559 = vmatprep.subr.bf16.mxu0 %v1026
    %1560 = vmatpush1.bf16.msra.mxu0 %v1025
    %1561 = vmatprep.subr.bf16.mxu0 %v1030
    %1562 = vmatpush1.bf16.msra.mxu0 %v1029
    %1563 = vmatprep.subr.bf16.mxu0 %v1034
    %1564 = vmatpush1.bf16.msra.mxu0 %v1033
    %1565 = vmatprep.subr.bf16.mxu0 %v1038
    %1566 = vmatpush1.bf16.msra.mxu0 %v1037
    %1567 = vmatprep.mubr.bf16.mxu0 %v163
    %1568 = vmatmul.mubr.bf16.gmra.mrb[0].mxu0 %v162
    %v1569 = vpop.f32.mrb[0].mxu0
    %v1570 = vadd.f32 %v378, %v1569
    %v1571 = vpop.f32.mrb[0].mxu0
    %v1572 = vadd.f32 %v382, %v1571
    %v1573 = vpop.f32.mrb[0].mxu0
    %v1574 = vpop.f32.mrb[0].mxu0
    %1575 = vdwg.mxu0
    %1576 = vmatprep.subr.bf16.mxu0 %v1042
    %1577 = vmatpush1.bf16.msra.mxu0 %v1041
    %1578 = vmatprep.subr.bf16.mxu0 %v1046
    %1579 = vmatpush1.bf16.msra.mxu0 %v1045
    %1580 = vmatprep.subr.bf16.mxu0 %v1050
    %1581 = vmatpush1.bf16.msra.mxu0 %v1049
    %1582 = vmatprep.subr.bf16.mxu0 %v1054
    %1583 = vmatpush1.bf16.msra.mxu0 %v1053
    %1584 = vmatprep.subr.bf16.mxu0 %v1058
    %1585 = vmatpush1.bf16.msra.mxu0 %v1057
    %1586 = vmatprep.subr.bf16.mxu0 %v1062
    %1587 = vmatpush1.bf16.msra.mxu0 %v1061
    %1588 = vmatprep.subr.bf16.mxu0 %v1066
    %1589 = vmatpush1.bf16.msra.mxu0 %v1065
    %1590 = vmatprep.subr.bf16.mxu0 %v1070
    %1591 = vmatpush1.bf16.msra.mxu0 %v1069
    %1592 = vmatprep.subr.bf16.mxu0 %v1074
    %1593 = vmatpush1.bf16.msra.mxu0 %v1073
    %1594 = vmatprep.subr.bf16.mxu0 %v1078
    %1595 = vmatpush1.bf16.msra.mxu0 %v1077
    %1596 = vmatprep.subr.bf16.mxu0 %v1082
    %1597 = vmatpush1.bf16.msra.mxu0 %v1081
    %1598 = vmatprep.subr.bf16.mxu0 %v1086
    %1599 = vmatpush1.bf16.msra.mxu0 %v1085
    %1600 = vmatprep.subr.bf16.mxu0 %v1090
    %1601 = vmatpush1.bf16.msra.mxu0 %v1089
    %1602 = vmatprep.subr.bf16.mxu0 %v1094
    %1603 = vmatpush1.bf16.msra.mxu0 %v1093
    %1604 = vmatprep.subr.bf16.mxu0 %v1098
    %1605 = vmatpush1.bf16.msra.mxu0 %v1097
    %1606 = vmatprep.subr.bf16.mxu0 %v1102
    %1607 = vmatpush1.bf16.msra.mxu0 %v1101
    %1608 = vmatprep.mubr.bf16.mxu0 %v165
    %1609 = vmatmul.mubr.bf16.gmra.mrb[0].mxu0 %v164
    %v1610 = vpop.f32.mrb[0].mxu0
    %v1611 = vadd.f32 %v1570, %v1610
    %v1612 = vpop.f32.mrb[0].mxu0
    %v1613 = vadd.f32 %v1572, %v1612
    %v1614 = vpop.f32.mrb[0].mxu0
    %v1615 = vpop.f32.mrb[0].mxu0
    %1616 = vdwg.mxu0
    %1617 = vmatprep.subr.bf16.mxu0 %v1106
    %1618 = vmatpush1.bf16.msra.mxu0 %v1105
    %1619 = vmatprep.subr.bf16.mxu0 %v1110
    %1620 = vmatpush1.bf16.msra.mxu0 %v1109
    %1621 = vmatprep.subr.bf16.mxu0 %v1114
    %1622 = vmatpush1.bf16.msra.mxu0 %v1113
    %1623 = vmatprep.subr.bf16.mxu0 %v1118
    %1624 = vmatpush1.bf16.msra.mxu0 %v1117
    %1625 = vmatprep.subr.bf16.mxu0 %v1122
    %1626 = vmatpush1.bf16.msra.mxu0 %v1121
    %1627 = vmatprep.subr.bf16.mxu0 %v1126
    %1628 = vmatpush1.bf16.msra.mxu0 %v1125
    %1629 = vmatprep.subr.bf16.mxu0 %v1130
    %1630 = vmatpush1.bf16.msra.mxu0 %v1129
    %1631 = vmatprep.subr.bf16.mxu0 %v1134
    %1632 = vmatpush1.bf16.msra.mxu0 %v1133
    %1633 = vmatprep.subr.bf16.mxu0 %v1138
    %1634 = vmatpush1.bf16.msra.mxu0 %v1137
    %1635 = vmatprep.subr.bf16.mxu0 %v1142
    %1636 = vmatpush1.bf16.msra.mxu0 %v1141
    %1637 = vmatprep.subr.bf16.mxu0 %v1146
    %1638 = vmatpush1.bf16.msra.mxu0 %v1145
    %1639 = vmatprep.subr.bf16.mxu0 %v1150
    %1640 = vmatpush1.bf16.msra.mxu0 %v1149
    %1641 = vmatprep.subr.bf16.mxu0 %v1154
    %1642 = vmatpush1.bf16.msra.mxu0 %v1153
    %1643 = vmatprep.subr.bf16.mxu0 %v1158
    %1644 = vmatpush1.bf16.msra.mxu0 %v1157
    %1645 = vmatprep.subr.bf16.mxu0 %v1162
    %1646 = vmatpush1.bf16.msra.mxu0 %v1161
    %1647 = vmatprep.subr.bf16.mxu0 %v1166
    %1648 = vmatpush1.bf16.msra.mxu0 %v1165
    %1649 = vmatprep.mubr.bf16.mxu0 %v167
    %1650 = vmatmul.mubr.bf16.gmra.mrb[0].mxu0 %v166
    %v1651 = vpop.f32.mrb[0].mxu0
    %v1652 = vadd.f32 %v1611, %v1651
    %v1653 = vpop.f32.mrb[0].mxu0
    %v1654 = vadd.f32 %v1613, %v1653
    %v1655 = vpop.f32.mrb[0].mxu0
    %v1656 = vpop.f32.mrb[0].mxu0
    %1657 = vdwg.mxu0
    %1658 = vmatprep.subr.bf16.mxu0 %v1170
    %1659 = vmatpush1.bf16.msra.mxu0 %v1169
    %1660 = vmatprep.subr.bf16.mxu0 0
    %1661 = vmatpush1.bf16.msra.mxu0 0
    %1662 = vmatprep.subr.bf16.mxu0 0
    %1663 = vmatpush1.bf16.msra.mxu0 0
    %1664 = vmatprep.subr.bf16.mxu0 0
    %1665 = vmatpush1.bf16.msra.mxu0 0
    %1666 = vmatprep.subr.bf16.mxu0 0
    %1667 = vmatpush1.bf16.msra.mxu0 0
    %1668 = vmatprep.subr.bf16.mxu0 0
    %1669 = vmatpush1.bf16.msra.mxu0 0
    %1670 = vmatprep.subr.bf16.mxu0 0
    %1671 = vmatpush1.bf16.msra.mxu0 0
    %1672 = vmatprep.subr.bf16.mxu0 0
    %1673 = vmatpush1.bf16.msra.mxu0 0
    %1674 = vmatprep.subr.bf16.mxu0 0
    %1675 = vmatpush1.bf16.msra.mxu0 0
    %1676 = vmatprep.subr.bf16.mxu0 0
    %1677 = vmatpush1.bf16.msra.mxu0 0
    %1678 = vmatprep.subr.bf16.mxu0 0
    %1679 = vmatpush1.bf16.msra.mxu0 0
    %1680 = vmatprep.subr.bf16.mxu0 0
    %1681 = vmatpush1.bf16.msra.mxu0 0
    %1682 = vmatprep.subr.bf16.mxu0 0
    %1683 = vmatpush1.bf16.msra.mxu0 0
    %1684 = vmatprep.subr.bf16.mxu0 0
    %1685 = vmatpush1.bf16.msra.mxu0 0
    %1686 = vmatprep.subr.bf16.mxu0 0
    %1687 = vmatpush1.bf16.msra.mxu0 0
    %1688 = vmatprep.subr.bf16.mxu0 0
    %1689 = vmatpush1.bf16.msra.mxu0 0
    %1690 = vmatprep.mubr.bf16.mxu0 0
    %1691 = vmatmul.mubr.bf16.gmra.mrb[0].mxu0 %v1369
    %v1692 = vpop.f32.mrb[0].mxu0
    %v1693 = vadd.f32 %v1652, %v1692
    %v1694 = vpop.f32.mrb[0].mxu0
    %v1695 = vadd.f32 %v1654, %v1694
    %v1696 = vpop.f32.mrb[0].mxu0
    %v1697 = vpop.f32.mrb[0].mxu0
    %1698 = vdwg.mxu0
    %v1699 = vmax.f32 %v1529, 0.0
    %v1700 = vmax.f32 %v1531, 0.0
    %v1701 = vmax.f32 %v1693, 0.0
    %v1702 = vmax.f32 %v1695, 0.0
    %v1703 = vpack.c.bf16 %v1699, %v1699
    %v1704 = vpack.c.bf16 %v1700, %v1700
    %v1705 = vpack.c.bf16 %v1701, %v1701
    %v1706 = vpack.c.bf16 %v1702, %v1702
    %v1707 = vld [vmem:[#allocation4] sm:$0xff]
    %v1708 = vld [vmem:[#allocation4 + $0x8] sm:$0xff]
    %v1709 = vld [vmem:[#allocation4 + $0x10] sm:$0xff]
    %v1710 = vld [vmem:[#allocation4 + $0x18] sm:$0xff]
    %v1711 = vld [vmem:[#allocation4 + $0x20] sm:$0xff]
    %v1712 = vld [vmem:[#allocation4 + $0x28] sm:$0xff]
    %v1713 = vld [vmem:[#allocation4 + $0x30] sm:$0xff]
    %v1714 = vld [vmem:[#allocation4 + $0x38] sm:$0xff]
    %v1715 = vld [vmem:[#allocation4 + $0x40] sm:$0xff]
    %v1716 = vld [vmem:[#allocation4 + $0x48] sm:$0xff]
    %v1717 = vld [vmem:[#allocation4 + $0x50] sm:$0xff]
    %v1718 = vld [vmem:[#allocation4 + $0x58] sm:$0xff]
    %v1719 = vld [vmem:[#allocation4 + $0x60] sm:$0xff]
    %v1720 = vld [vmem:[#allocation4 + $0x68] sm:$0xff]
    %v1721 = vld [vmem:[#allocation4 + $0x70] sm:$0xff]
    %v1722 = vld [vmem:[#allocation4 + $0x78] sm:$0xff]
    %v1723 = vld [vmem:[#allocation4 + $0x80] sm:$0xff]
    %v1724 = vld [vmem:[#allocation4 + $0x88] sm:$0xff]
    %v1725 = vld [vmem:[#allocation4 + $0x90] sm:$0xff]
    %v1726 = vld [vmem:[#allocation4 + $0x98] sm:$0xff]
    %v1727 = vld [vmem:[#allocation4 + $0xa0] sm:$0xff]
    %v1728 = vld [vmem:[#allocation4 + $0xa8] sm:$0xff]
    %v1729 = vld [vmem:[#allocation4 + $0xb0] sm:$0xff]
    %v1730 = vld [vmem:[#allocation4 + $0xb8] sm:$0xff]
    %v1731 = vld [vmem:[#allocation4 + $0xc0] sm:$0xff]
    %v1732 = vld [vmem:[#allocation4 + $0xc8] sm:$0xff]
    %v1733 = vld [vmem:[#allocation4 + $0xd0] sm:$0xff]
    %v1734 = vld [vmem:[#allocation4 + $0xd8] sm:$0xff]
    %v1735 = vld [vmem:[#allocation4 + $0xe0] sm:$0xff]
    %v1736 = vld [vmem:[#allocation4 + $0xe8] sm:$0xff]
    %v1737 = vld [vmem:[#allocation4 + $0xf0] sm:$0xff]
    %v1738 = vld [vmem:[#allocation4 + $0xf8] sm:$0xff]
    %v1739 = vld [vmem:[#allocation4 + $0x100] sm:$0xff]
    %v1740 = vld [vmem:[#allocation4 + $0x108] sm:$0xff]
    %v1741 = vld [vmem:[#allocation4 + $0x110] sm:$0xff]
    %v1742 = vld [vmem:[#allocation4 + $0x118] sm:$0xff]
    %v1743 = vld [vmem:[#allocation4 + $0x120] sm:$0xff]
    %v1744 = vld [vmem:[#allocation4 + $0x128] sm:$0xff]
    %v1745 = vld [vmem:[#allocation4 + $0x130] sm:$0xff]
    %v1746 = vld [vmem:[#allocation4 + $0x138] sm:$0xff]
    %v1747 = vld [vmem:[#allocation4 + $0x140] sm:$0xff]
    %v1748 = vld [vmem:[#allocation4 + $0x148] sm:$0xff]
    %v1749 = vld [vmem:[#allocation4 + $0x150] sm:$0xff]
    %v1750 = vld [vmem:[#allocation4 + $0x158] sm:$0xff]
    %v1751 = vld [vmem:[#allocation4 + $0x160] sm:$0xff]
    %v1752 = vld [vmem:[#allocation4 + $0x168] sm:$0xff]
    %v1753 = vld [vmem:[#allocation4 + $0x170] sm:$0xff]
    %v1754 = vld [vmem:[#allocation4 + $0x178] sm:$0xff]
    %v1755 = vld [vmem:[#allocation4 + $0x180] sm:$0xff]
    %v1756 = vld [vmem:[#allocation4 + $0x188] sm:$0xff]
    %v1757 = vld [vmem:[#allocation4 + $0x190] sm:$0xff]
    %v1758 = vld [vmem:[#allocation4 + $0x198] sm:$0xff]
    %v1759 = vld [vmem:[#allocation4 + $0x1a0] sm:$0xff]
    %v1760 = vld [vmem:[#allocation4 + $0x1a8] sm:$0xff]
    %v1761 = vld [vmem:[#allocation4 + $0x1b0] sm:$0xff]
    %v1762 = vld [vmem:[#allocation4 + $0x1b8] sm:$0xff]
    %v1763 = vld [vmem:[#allocation4 + $0x1c0] sm:$0xff]
    %v1764 = vld [vmem:[#allocation4 + $0x1c8] sm:$0xff]
    %v1765 = vld [vmem:[#allocation4 + $0x1d0] sm:$0xff]
    %v1766 = vld [vmem:[#allocation4 + $0x1d8] sm:$0xff]
    %v1767 = vld [vmem:[#allocation4 + $0x1e0] sm:$0xff]
    %v1768 = vld [vmem:[#allocation4 + $0x1e8] sm:$0xff]
    %v1769 = vld [vmem:[#allocation4 + $0x1f0] sm:$0xff]
    %v1770 = vld [vmem:[#allocation4 + $0x1f8] sm:$0xff]
    %v1771 = vld [vmem:[#allocation4 + $0x200] sm:$0xff]
    %v1772 = vld [vmem:[#allocation4 + $0x208] sm:$0xff]
    %v1773 = vld [vmem:[#allocation4 + $0x210] sm:$0xff]
    %v1774 = vld [vmem:[#allocation4 + $0x218] sm:$0xff]
    %v1775 = vld [vmem:[#allocation4 + $0x220] sm:$0xff]
    %v1776 = vld [vmem:[#allocation4 + $0x228] sm:$0xff]
    %v1777 = vld [vmem:[#allocation4 + $0x230] sm:$0xff]
    %v1778 = vld [vmem:[#allocation4 + $0x238] sm:$0xff]
    %v1779 = vld [vmem:[#allocation4 + $0x240] sm:$0xff]
    %v1780 = vld [vmem:[#allocation4 + $0x248] sm:$0xff]
    %v1781 = vld [vmem:[#allocation4 + $0x250] sm:$0xff]
    %v1782 = vld [vmem:[#allocation4 + $0x258] sm:$0xff]
    %v1783 = vld [vmem:[#allocation4 + $0x260] sm:$0xff]
    %v1784 = vld [vmem:[#allocation4 + $0x268] sm:$0xff]
    %v1785 = vld [vmem:[#allocation4 + $0x270] sm:$0xff]
    %v1786 = vld [vmem:[#allocation4 + $0x278] sm:$0xff]
    %v1787 = vld [vmem:[#allocation4 + $0x280] sm:$0xff]
    %v1788 = vld [vmem:[#allocation4 + $0x288] sm:$0xff]
    %v1789 = vld [vmem:[#allocation4 + $0x290] sm:$0xff]
    %v1790 = vld [vmem:[#allocation4 + $0x298] sm:$0xff]
    %v1791 = vld [vmem:[#allocation4 + $0x2a0] sm:$0xff]
    %v1792 = vld [vmem:[#allocation4 + $0x2a8] sm:$0xff]
    %v1793 = vld [vmem:[#allocation4 + $0x2b0] sm:$0xff]
    %v1794 = vld [vmem:[#allocation4 + $0x2b8] sm:$0xff]
    %v1795 = vld [vmem:[#allocation4 + $0x2c0] sm:$0xff]
    %v1796 = vld [vmem:[#allocation4 + $0x2c8] sm:$0xff]
    %v1797 = vld [vmem:[#allocation4 + $0x2d0] sm:$0xff]
    %v1798 = vld [vmem:[#allocation4 + $0x2d8] sm:$0xff]
    %v1799 = vld [vmem:[#allocation4 + $0x2e0] sm:$0xff]
    %v1800 = vld [vmem:[#allocation4 + $0x2e8] sm:$0xff]
    %v1801 = vld [vmem:[#allocation4 + $0x2f0] sm:$0xff]
    %v1802 = vld [vmem:[#allocation4 + $0x2f8] sm:$0xff]
    %v1803 = vld [vmem:[#allocation4 + $0x300] sm:$0xff]
    %v1804 = vld [vmem:[#allocation4 + $0x308] sm:$0xff]
    %v1805 = vld [vmem:[#allocation4 + $0x310] sm:$0xff]
    %v1806 = vld [vmem:[#allocation4 + $0x318] sm:$0xff]
    %v1807 = vld [vmem:[#allocation4 + $0x320] sm:$0xff]
    %v1808 = vld [vmem:[#allocation4 + $0x328] sm:$0xff]
    %v1809 = vld [vmem:[#allocation4 + $0x330] sm:$0xff]
    %v1810 = vld [vmem:[#allocation4 + $0x338] sm:$0xff]
    %v1811 = vld [vmem:[#allocation4 + $0x340] sm:$0xff]
    %v1812 = vld [vmem:[#allocation4 + $0x348] sm:$0xff]
    %v1813 = vld [vmem:[#allocation4 + $0x350] sm:$0xff]
    %v1814 = vld [vmem:[#allocation4 + $0x358] sm:$0xff]
    %v1815 = vld [vmem:[#allocation4 + $0x360] sm:$0xff]
    %v1816 = vld [vmem:[#allocation4 + $0x368] sm:$0xff]
    %v1817 = vld [vmem:[#allocation4 + $0x370] sm:$0xff]
    %v1818 = vld [vmem:[#allocation4 + $0x378] sm:$0xff]
    %v1819 = vld [vmem:[#allocation4 + $0x380] sm:$0xff]
    %v1820 = vld [vmem:[#allocation4 + $0x388] sm:$0xff]
    %v1821 = vld [vmem:[#allocation4 + $0x390] sm:$0xff]
    %v1822 = vld [vmem:[#allocation4 + $0x398] sm:$0xff]
    %v1823 = vld [vmem:[#allocation4 + $0x3a0] sm:$0xff]
    %v1824 = vld [vmem:[#allocation4 + $0x3a8] sm:$0xff]
    %v1825 = vld [vmem:[#allocation4 + $0x3b0] sm:$0xff]
    %v1826 = vld [vmem:[#allocation4 + $0x3b8] sm:$0xff]
    %v1827 = vld [vmem:[#allocation4 + $0x3c0] sm:$0xff]
    %v1828 = vld [vmem:[#allocation4 + $0x3c8] sm:$0xff]
    %v1829 = vld [vmem:[#allocation4 + $0x3d0] sm:$0xff]
    %v1830 = vld [vmem:[#allocation4 + $0x3d8] sm:$0xff]
    %v1831 = vld [vmem:[#allocation4 + $0x3e0] sm:$0xff]
    %v1832 = vld [vmem:[#allocation4 + $0x3e8] sm:$0xff]
    %v1833 = vld [vmem:[#allocation4 + $0x3f0] sm:$0xff]
    %v1834 = vld [vmem:[#allocation4 + $0x3f8] sm:$0xff]
    %v1835 = vld [vmem:[%s4] sm:$0xf]
    %v1837 = vlaneseq
    %v1838 = vshrl.u32 %v1837, 7
    %v1839 = vsub.s32 0, %v1838
    %v1840 = vrot.slane %v1835, %v1839
    %v1841 = vlaneseq
    %v1842 = vshrl.u32 %v1841, 7
    %v1843 = vsub.s32 1, %v1842
    %v1844 = vrot.slane %v1835, %v1843
    %v1845 = vlaneseq
    %v1846 = vshrl.u32 %v1845, 7
    %v1847 = vsub.s32 2, %v1846
    %v1848 = vrot.slane %v1835, %v1847
    %v1849 = vlaneseq
    %v1850 = vshrl.u32 %v1849, 7
    %v1851 = vsub.s32 3, %v1850
    %v1852 = vrot.slane %v1835, %v1851
    %v1985 = vunpack.c.l.b16 %v1707
    %v1986 = vunpack.c.h.b16 %v1707
    %v1987 = vunpack.c.l.b16 %v1708
    %v1988 = vunpack.c.h.b16 %v1708
    %v1989 = vunpack.c.l.b16 %v1709
    %v1990 = vunpack.c.h.b16 %v1709
    %v1991 = vunpack.c.l.b16 %v1710
    %v1992 = vunpack.c.h.b16 %v1710
    %v1993 = vunpack.c.l.b16 %v1711
    %v1994 = vunpack.c.h.b16 %v1711
    %v1995 = vunpack.c.l.b16 %v1712
    %v1996 = vunpack.c.h.b16 %v1712
    %v1997 = vunpack.c.l.b16 %v1713
    %v1998 = vunpack.c.h.b16 %v1713
    %v1999 = vunpack.c.l.b16 %v1714
    %v2000 = vunpack.c.h.b16 %v1714
    %v2001 = vunpack.c.l.b16 %v1715
    %v2002 = vunpack.c.h.b16 %v1715
    %v2003 = vunpack.c.l.b16 %v1716
    %v2004 = vunpack.c.h.b16 %v1716
    %v2005 = vunpack.c.l.b16 %v1717
    %v2006 = vunpack.c.h.b16 %v1717
    %v2007 = vunpack.c.l.b16 %v1718
    %v2008 = vunpack.c.h.b16 %v1718
    %v2009 = vunpack.c.l.b16 %v1719
    %v2010 = vunpack.c.h.b16 %v1719
    %v2011 = vunpack.c.l.b16 %v1720
    %v2012 = vunpack.c.h.b16 %v1720
    %v2013 = vunpack.c.l.b16 %v1721
    %v2014 = vunpack.c.h.b16 %v1721
    %v2015 = vunpack.c.l.b16 %v1722
    %v2016 = vunpack.c.h.b16 %v1722
    %v2017 = vunpack.c.l.b16 %v1723
    %v2018 = vunpack.c.h.b16 %v1723
    %v2019 = vunpack.c.l.b16 %v1724
    %v2020 = vunpack.c.h.b16 %v1724
    %v2021 = vunpack.c.l.b16 %v1725
    %v2022 = vunpack.c.h.b16 %v1725
    %v2023 = vunpack.c.l.b16 %v1726
    %v2024 = vunpack.c.h.b16 %v1726
    %v2025 = vunpack.c.l.b16 %v1727
    %v2026 = vunpack.c.h.b16 %v1727
    %v2027 = vunpack.c.l.b16 %v1728
    %v2028 = vunpack.c.h.b16 %v1728
    %v2029 = vunpack.c.l.b16 %v1729
    %v2030 = vunpack.c.h.b16 %v1729
    %v2031 = vunpack.c.l.b16 %v1730
    %v2032 = vunpack.c.h.b16 %v1730
    %v2033 = vunpack.c.l.b16 %v1731
    %v2034 = vunpack.c.h.b16 %v1731
    %v2035 = vunpack.c.l.b16 %v1732
    %v2036 = vunpack.c.h.b16 %v1732
    %v2037 = vunpack.c.l.b16 %v1733
    %v2038 = vunpack.c.h.b16 %v1733
    %v2039 = vunpack.c.l.b16 %v1734
    %v2040 = vunpack.c.h.b16 %v1734
    %v2041 = vunpack.c.l.b16 %v1735
    %v2042 = vunpack.c.h.b16 %v1735
    %v2043 = vunpack.c.l.b16 %v1736
    %v2044 = vunpack.c.h.b16 %v1736
    %v2045 = vunpack.c.l.b16 %v1737
    %v2046 = vunpack.c.h.b16 %v1737
    %v2047 = vunpack.c.l.b16 %v1738
    %v2048 = vunpack.c.h.b16 %v1738
    %v2049 = vunpack.c.l.b16 %v1739
    %v2050 = vunpack.c.h.b16 %v1739
    %v2051 = vunpack.c.l.b16 %v1740
    %v2052 = vunpack.c.h.b16 %v1740
    %v2053 = vunpack.c.l.b16 %v1741
    %v2054 = vunpack.c.h.b16 %v1741
    %v2055 = vunpack.c.l.b16 %v1742
    %v2056 = vunpack.c.h.b16 %v1742
    %v2057 = vunpack.c.l.b16 %v1743
    %v2058 = vunpack.c.h.b16 %v1743
    %v2059 = vunpack.c.l.b16 %v1744
    %v2060 = vunpack.c.h.b16 %v1744
    %v2061 = vunpack.c.l.b16 %v1745
    %v2062 = vunpack.c.h.b16 %v1745
    %v2063 = vunpack.c.l.b16 %v1746
    %v2064 = vunpack.c.h.b16 %v1746
    %v2065 = vunpack.c.l.b16 %v1747
    %v2066 = vunpack.c.h.b16 %v1747
    %v2067 = vunpack.c.l.b16 %v1748
    %v2068 = vunpack.c.h.b16 %v1748
    %v2069 = vunpack.c.l.b16 %v1749
    %v2070 = vunpack.c.h.b16 %v1749
    %v2071 = vunpack.c.l.b16 %v1750
    %v2072 = vunpack.c.h.b16 %v1750
    %v2073 = vunpack.c.l.b16 %v1751
    %v2074 = vunpack.c.h.b16 %v1751
    %v2075 = vunpack.c.l.b16 %v1752
    %v2076 = vunpack.c.h.b16 %v1752
    %v2077 = vunpack.c.l.b16 %v1753
    %v2078 = vunpack.c.h.b16 %v1753
    %v2079 = vunpack.c.l.b16 %v1754
    %v2080 = vunpack.c.h.b16 %v1754
    %v2081 = vunpack.c.l.b16 %v1755
    %v2082 = vunpack.c.h.b16 %v1755
    %v2083 = vunpack.c.l.b16 %v1756
    %v2084 = vunpack.c.h.b16 %v1756
    %v2085 = vunpack.c.l.b16 %v1757
    %v2086 = vunpack.c.h.b16 %v1757
    %v2087 = vunpack.c.l.b16 %v1758
    %v2088 = vunpack.c.h.b16 %v1758
    %v2089 = vunpack.c.l.b16 %v1759
    %v2090 = vunpack.c.h.b16 %v1759
    %v2091 = vunpack.c.l.b16 %v1760
    %v2092 = vunpack.c.h.b16 %v1760
    %v2093 = vunpack.c.l.b16 %v1761
    %v2094 = vunpack.c.h.b16 %v1761
    %v2095 = vunpack.c.l.b16 %v1762
    %v2096 = vunpack.c.h.b16 %v1762
    %v2097 = vunpack.c.l.b16 %v1763
    %v2098 = vunpack.c.h.b16 %v1763
    %v2099 = vunpack.c.l.b16 %v1764
    %v2100 = vunpack.c.h.b16 %v1764
    %v2101 = vunpack.c.l.b16 %v1765
    %v2102 = vunpack.c.h.b16 %v1765
    %v2103 = vunpack.c.l.b16 %v1766
    %v2104 = vunpack.c.h.b16 %v1766
    %v2105 = vunpack.c.l.b16 %v1767
    %v2106 = vunpack.c.h.b16 %v1767
    %v2107 = vunpack.c.l.b16 %v1768
    %v2108 = vunpack.c.h.b16 %v1768
    %v2109 = vunpack.c.l.b16 %v1769
    %v2110 = vunpack.c.h.b16 %v1769
    %v2111 = vunpack.c.l.b16 %v1770
    %v2112 = vunpack.c.h.b16 %v1770
    %v2113 = vunpack.c.l.b16 %v1771
    %v2114 = vunpack.c.h.b16 %v1771
    %v2115 = vunpack.c.l.b16 %v1772
    %v2116 = vunpack.c.h.b16 %v1772
    %v2117 = vunpack.c.l.b16 %v1773
    %v2118 = vunpack.c.h.b16 %v1773
    %v2119 = vunpack.c.l.b16 %v1774
    %v2120 = vunpack.c.h.b16 %v1774
    %v2121 = vunpack.c.l.b16 %v1775
    %v2122 = vunpack.c.h.b16 %v1775
    %v2123 = vunpack.c.l.b16 %v1776
    %v2124 = vunpack.c.h.b16 %v1776
    %v2125 = vunpack.c.l.b16 %v1777
    %v2126 = vunpack.c.h.b16 %v1777
    %v2127 = vunpack.c.l.b16 %v1778
    %v2128 = vunpack.c.h.b16 %v1778
    %v2129 = vunpack.c.l.b16 %v1779
    %v2130 = vunpack.c.h.b16 %v1779
    %v2131 = vunpack.c.l.b16 %v1780
    %v2132 = vunpack.c.h.b16 %v1780
    %v2133 = vunpack.c.l.b16 %v1781
    %v2134 = vunpack.c.h.b16 %v1781
    %v2135 = vunpack.c.l.b16 %v1782
    %v2136 = vunpack.c.h.b16 %v1782
    %v2137 = vunpack.c.l.b16 %v1783
    %v2138 = vunpack.c.h.b16 %v1783
    %v2139 = vunpack.c.l.b16 %v1784
    %v2140 = vunpack.c.h.b16 %v1784
    %v2141 = vunpack.c.l.b16 %v1785
    %v2142 = vunpack.c.h.b16 %v1785
    %v2143 = vunpack.c.l.b16 %v1786
    %v2144 = vunpack.c.h.b16 %v1786
    %v2145 = vunpack.c.l.b16 %v1787
    %v2146 = vunpack.c.h.b16 %v1787
    %v2147 = vunpack.c.l.b16 %v1788
    %v2148 = vunpack.c.h.b16 %v1788
    %v2149 = vunpack.c.l.b16 %v1789
    %v2150 = vunpack.c.h.b16 %v1789
    %v2151 = vunpack.c.l.b16 %v1790
    %v2152 = vunpack.c.h.b16 %v1790
    %v2153 = vunpack.c.l.b16 %v1791
    %v2154 = vunpack.c.h.b16 %v1791
    %v2155 = vunpack.c.l.b16 %v1792
    %v2156 = vunpack.c.h.b16 %v1792
    %v2157 = vunpack.c.l.b16 %v1793
    %v2158 = vunpack.c.h.b16 %v1793
    %v2159 = vunpack.c.l.b16 %v1794
    %v2160 = vunpack.c.h.b16 %v1794
    %v2161 = vunpack.c.l.b16 %v1795
    %v2162 = vunpack.c.h.b16 %v1795
    %v2163 = vunpack.c.l.b16 %v1796
    %v2164 = vunpack.c.h.b16 %v1796
    %v2165 = vunpack.c.l.b16 %v1797
    %v2166 = vunpack.c.h.b16 %v1797
    %v2167 = vunpack.c.l.b16 %v1798
    %v2168 = vunpack.c.h.b16 %v1798
    %v2169 = vunpack.c.l.b16 %v1799
    %v2170 = vunpack.c.h.b16 %v1799
    %v2171 = vunpack.c.l.b16 %v1800
    %v2172 = vunpack.c.h.b16 %v1800
    %v2173 = vunpack.c.l.b16 %v1801
    %v2174 = vunpack.c.h.b16 %v1801
    %v2175 = vunpack.c.l.b16 %v1802
    %v2176 = vunpack.c.h.b16 %v1802
    %v2177 = vunpack.c.l.b16 %v1803
    %v2178 = vunpack.c.h.b16 %v1803
    %v2179 = vunpack.c.l.b16 %v1804
    %v2180 = vunpack.c.h.b16 %v1804
    %v2181 = vunpack.c.l.b16 %v1805
    %v2182 = vunpack.c.h.b16 %v1805
    %v2183 = vunpack.c.l.b16 %v1806
    %v2184 = vunpack.c.h.b16 %v1806
    %v2185 = vunpack.c.l.b16 %v1807
    %v2186 = vunpack.c.h.b16 %v1807
    %v2187 = vunpack.c.l.b16 %v1808
    %v2188 = vunpack.c.h.b16 %v1808
    %v2189 = vunpack.c.l.b16 %v1809
    %v2190 = vunpack.c.h.b16 %v1809
    %v2191 = vunpack.c.l.b16 %v1810
    %v2192 = vunpack.c.h.b16 %v1810
    %v2193 = vunpack.c.l.b16 %v1811
    %v2194 = vunpack.c.h.b16 %v1811
    %v2195 = vunpack.c.l.b16 %v1812
    %v2196 = vunpack.c.h.b16 %v1812
    %v2197 = vunpack.c.l.b16 %v1813
    %v2198 = vunpack.c.h.b16 %v1813
    %v2199 = vunpack.c.l.b16 %v1814
    %v2200 = vunpack.c.h.b16 %v1814
    %v2201 = vunpack.c.l.b16 %v1815
    %v2202 = vunpack.c.h.b16 %v1815
    %v2203 = vunpack.c.l.b16 %v1816
    %v2204 = vunpack.c.h.b16 %v1816
    %v2205 = vunpack.c.l.b16 %v1817
    %v2206 = vunpack.c.h.b16 %v1817
    %v2207 = vunpack.c.l.b16 %v1818
    %v2208 = vunpack.c.h.b16 %v1818
    %v2209 = vunpack.c.l.b16 %v1819
    %v2210 = vunpack.c.h.b16 %v1819
    %v2211 = vunpack.c.l.b16 %v1820
    %v2212 = vunpack.c.h.b16 %v1820
    %v2213 = vunpack.c.l.b16 %v1821
    %v2214 = vunpack.c.h.b16 %v1821
    %v2215 = vunpack.c.l.b16 %v1822
    %v2216 = vunpack.c.h.b16 %v1822
    %v2217 = vunpack.c.l.b16 %v1823
    %v2218 = vunpack.c.h.b16 %v1823
    %v2219 = vunpack.c.l.b16 %v1824
    %v2220 = vunpack.c.h.b16 %v1824
    %v2221 = vunpack.c.l.b16 %v1825
    %v2222 = vunpack.c.h.b16 %v1825
    %v2223 = vunpack.c.l.b16 %v1826
    %v2224 = vunpack.c.h.b16 %v1826
    %v2225 = vunpack.c.l.b16 %v1827
    %v2226 = vunpack.c.h.b16 %v1827
    %v2227 = vunpack.c.l.b16 %v1828
    %v2228 = vunpack.c.h.b16 %v1828
    %v2229 = vunpack.c.l.b16 %v1829
    %v2230 = vunpack.c.h.b16 %v1829
    %v2231 = vunpack.c.l.b16 %v1830
    %v2232 = vunpack.c.h.b16 %v1830
    %v2233 = vunpack.c.l.b16 %v1831
    %v2234 = vunpack.c.h.b16 %v1831
    %v2235 = vunpack.c.l.b16 %v1832
    %v2236 = vunpack.c.h.b16 %v1832
    %v2237 = vunpack.c.l.b16 %v1833
    %v2238 = vunpack.c.h.b16 %v1833
    %v2239 = vunpack.c.l.b16 %v1834
    %v2240 = vunpack.c.h.b16 %v1834
    %v2241 = vpack.c.b16 %v1989, %v1985
    %v2242 = vpack.c.b16 %v1990, %v1986
    %v2243 = vpack.c.b16 %v1991, %v1987
    %v2244 = vpack.c.b16 %v1992, %v1988
    %v2245 = vpack.c.b16 %v1997, %v1993
    %v2246 = vpack.c.b16 %v1998, %v1994
    %v2247 = vpack.c.b16 %v1999, %v1995
    %v2248 = vpack.c.b16 %v2000, %v1996
    %v2249 = vpack.c.b16 %v2005, %v2001
    %v2250 = vpack.c.b16 %v2006, %v2002
    %v2251 = vpack.c.b16 %v2007, %v2003
    %v2252 = vpack.c.b16 %v2008, %v2004
    %v2253 = vpack.c.b16 %v2013, %v2009
    %v2254 = vpack.c.b16 %v2014, %v2010
    %v2255 = vpack.c.b16 %v2015, %v2011
    %v2256 = vpack.c.b16 %v2016, %v2012
    %v2257 = vpack.c.b16 %v2021, %v2017
    %v2258 = vpack.c.b16 %v2022, %v2018
    %v2259 = vpack.c.b16 %v2023, %v2019
    %v2260 = vpack.c.b16 %v2024, %v2020
    %v2261 = vpack.c.b16 %v2029, %v2025
    %v2262 = vpack.c.b16 %v2030, %v2026
    %v2263 = vpack.c.b16 %v2031, %v2027
    %v2264 = vpack.c.b16 %v2032, %v2028
    %v2265 = vpack.c.b16 %v2037, %v2033
    %v2266 = vpack.c.b16 %v2038, %v2034
    %v2267 = vpack.c.b16 %v2039, %v2035
    %v2268 = vpack.c.b16 %v2040, %v2036
    %v2269 = vpack.c.b16 %v2045, %v2041
    %v2270 = vpack.c.b16 %v2046, %v2042
    %v2271 = vpack.c.b16 %v2047, %v2043
    %v2272 = vpack.c.b16 %v2048, %v2044
    %v2273 = vpack.c.b16 %v2053, %v2049
    %v2274 = vpack.c.b16 %v2054, %v2050
    %v2275 = vpack.c.b16 %v2055, %v2051
    %v2276 = vpack.c.b16 %v2056, %v2052
    %v2277 = vpack.c.b16 %v2061, %v2057
    %v2278 = vpack.c.b16 %v2062, %v2058
    %v2279 = vpack.c.b16 %v2063, %v2059
    %v2280 = vpack.c.b16 %v2064, %v2060
    %v2281 = vpack.c.b16 %v2069, %v2065
    %v2282 = vpack.c.b16 %v2070, %v2066
    %v2283 = vpack.c.b16 %v2071, %v2067
    %v2284 = vpack.c.b16 %v2072, %v2068
    %v2285 = vpack.c.b16 %v2077, %v2073
    %v2286 = vpack.c.b16 %v2078, %v2074
    %v2287 = vpack.c.b16 %v2079, %v2075
    %v2288 = vpack.c.b16 %v2080, %v2076
    %v2289 = vpack.c.b16 %v2085, %v2081
    %v2290 = vpack.c.b16 %v2086, %v2082
    %v2291 = vpack.c.b16 %v2087, %v2083
    %v2292 = vpack.c.b16 %v2088, %v2084
    %v2293 = vpack.c.b16 %v2093, %v2089
    %v2294 = vpack.c.b16 %v2094, %v2090
    %v2295 = vpack.c.b16 %v2095, %v2091
    %v2296 = vpack.c.b16 %v2096, %v2092
    %v2297 = vpack.c.b16 %v2101, %v2097
    %v2298 = vpack.c.b16 %v2102, %v2098
    %v2299 = vpack.c.b16 %v2103, %v2099
    %v2300 = vpack.c.b16 %v2104, %v2100
    %v2301 = vpack.c.b16 %v2109, %v2105
    %v2302 = vpack.c.b16 %v2110, %v2106
    %v2303 = vpack.c.b16 %v2111, %v2107
    %v2304 = vpack.c.b16 %v2112, %v2108
    %v2305 = vpack.c.b16 %v2117, %v2113
    %v2306 = vpack.c.b16 %v2118, %v2114
    %v2307 = vpack.c.b16 %v2119, %v2115
    %v2308 = vpack.c.b16 %v2120, %v2116
    %v2309 = vpack.c.b16 %v2125, %v2121
    %v2310 = vpack.c.b16 %v2126, %v2122
    %v2311 = vpack.c.b16 %v2127, %v2123
    %v2312 = vpack.c.b16 %v2128, %v2124
    %v2313 = vpack.c.b16 %v2133, %v2129
    %v2314 = vpack.c.b16 %v2134, %v2130
    %v2315 = vpack.c.b16 %v2135, %v2131
    %v2316 = vpack.c.b16 %v2136, %v2132
    %v2317 = vpack.c.b16 %v2141, %v2137
    %v2318 = vpack.c.b16 %v2142, %v2138
    %v2319 = vpack.c.b16 %v2143, %v2139
    %v2320 = vpack.c.b16 %v2144, %v2140
    %v2321 = vpack.c.b16 %v2149, %v2145
    %v2322 = vpack.c.b16 %v2150, %v2146
    %v2323 = vpack.c.b16 %v2151, %v2147
    %v2324 = vpack.c.b16 %v2152, %v2148
    %v2325 = vpack.c.b16 %v2157, %v2153
    %v2326 = vpack.c.b16 %v2158, %v2154
    %v2327 = vpack.c.b16 %v2159, %v2155
    %v2328 = vpack.c.b16 %v2160, %v2156
    %v2329 = vpack.c.b16 %v2165, %v2161
    %v2330 = vpack.c.b16 %v2166, %v2162
    %v2331 = vpack.c.b16 %v2167, %v2163
    %v2332 = vpack.c.b16 %v2168, %v2164
    %v2333 = vpack.c.b16 %v2173, %v2169
    %v2334 = vpack.c.b16 %v2174, %v2170
    %v2335 = vpack.c.b16 %v2175, %v2171
    %v2336 = vpack.c.b16 %v2176, %v2172
    %v2337 = vpack.c.b16 %v2181, %v2177
    %v2338 = vpack.c.b16 %v2182, %v2178
    %v2339 = vpack.c.b16 %v2183, %v2179
    %v2340 = vpack.c.b16 %v2184, %v2180
    %v2341 = vpack.c.b16 %v2189, %v2185
    %v2342 = vpack.c.b16 %v2190, %v2186
    %v2343 = vpack.c.b16 %v2191, %v2187
    %v2344 = vpack.c.b16 %v2192, %v2188
    %v2345 = vpack.c.b16 %v2197, %v2193
    %v2346 = vpack.c.b16 %v2198, %v2194
    %v2347 = vpack.c.b16 %v2199, %v2195
    %v2348 = vpack.c.b16 %v2200, %v2196
    %v2349 = vpack.c.b16 %v2205, %v2201
    %v2350 = vpack.c.b16 %v2206, %v2202
    %v2351 = vpack.c.b16 %v2207, %v2203
    %v2352 = vpack.c.b16 %v2208, %v2204
    %v2353 = vpack.c.b16 %v2213, %v2209
    %v2354 = vpack.c.b16 %v2214, %v2210
    %v2355 = vpack.c.b16 %v2215, %v2211
    %v2356 = vpack.c.b16 %v2216, %v2212
    %v2357 = vpack.c.b16 %v2221, %v2217
    %v2358 = vpack.c.b16 %v2222, %v2218
    %v2359 = vpack.c.b16 %v2223, %v2219
    %v2360 = vpack.c.b16 %v2224, %v2220
    %v2361 = vpack.c.b16 %v2229, %v2225
    %v2362 = vpack.c.b16 %v2230, %v2226
    %v2363 = vpack.c.b16 %v2231, %v2227
    %v2364 = vpack.c.b16 %v2232, %v2228
    %v2365 = vpack.c.b16 %v2237, %v2233
    %v2366 = vpack.c.b16 %v2238, %v2234
    %v2367 = vpack.c.b16 %v2239, %v2235
    %v2368 = vpack.c.b16 %v2240, %v2236
    %2497 = vmatprep.subr.bf16.mxu0 %v2242
    %2498 = vmatpush1.bf16.msra.mxu0 %v2241
    %2499 = vmatprep.subr.bf16.mxu0 %v2246
    %2500 = vmatpush1.bf16.msra.mxu0 %v2245
    %2501 = vmatprep.subr.bf16.mxu0 %v2250
    %2502 = vmatpush1.bf16.msra.mxu0 %v2249
    %2503 = vmatprep.subr.bf16.mxu0 %v2254
    %2504 = vmatpush1.bf16.msra.mxu0 %v2253
    %2505 = vmatprep.subr.bf16.mxu0 %v2258
    %2506 = vmatpush1.bf16.msra.mxu0 %v2257
    %2507 = vmatprep.subr.bf16.mxu0 %v2262
    %2508 = vmatpush1.bf16.msra.mxu0 %v2261
    %2509 = vmatprep.subr.bf16.mxu0 %v2266
    %2510 = vmatpush1.bf16.msra.mxu0 %v2265
    %2511 = vmatprep.subr.bf16.mxu0 %v2270
    %2512 = vmatpush1.bf16.msra.mxu0 %v2269
    %2513 = vmatprep.subr.bf16.mxu0 %v2274
    %2514 = vmatpush1.bf16.msra.mxu0 %v2273
    %2515 = vmatprep.subr.bf16.mxu0 %v2278
    %2516 = vmatpush1.bf16.msra.mxu0 %v2277
    %2517 = vmatprep.subr.bf16.mxu0 %v2282
    %2518 = vmatpush1.bf16.msra.mxu0 %v2281
    %2519 = vmatprep.subr.bf16.mxu0 %v2286
    %2520 = vmatpush1.bf16.msra.mxu0 %v2285
    %2521 = vmatprep.subr.bf16.mxu0 %v2290
    %2522 = vmatpush1.bf16.msra.mxu0 %v2289
    %2523 = vmatprep.subr.bf16.mxu0 %v2294
    %2524 = vmatpush1.bf16.msra.mxu0 %v2293
    %2525 = vmatprep.subr.bf16.mxu0 %v2298
    %2526 = vmatpush1.bf16.msra.mxu0 %v2297
    %2527 = vmatprep.subr.bf16.mxu0 %v2302
    %2528 = vmatpush1.bf16.msra.mxu0 %v2301
    %2529 = vmatprep.mubr.bf16.mxu0 %v1704
    %2530 = vmatmul.mubr.bf16.gmra.mrb[0].mxu0 %v1703
    %v2531 = vpop.f32.mrb[0].mxu0
    %v2532 = vadd.f32 %v1840, %v2531
    %v2533 = vpop.f32.mrb[0].mxu0
    %v2534 = vadd.f32 %v1844, %v2533
    %v2535 = vpop.f32.mrb[0].mxu0
    %v2536 = vpop.f32.mrb[0].mxu0
    %2537 = vdwg.mxu0
    %2538 = vmatprep.subr.bf16.mxu0 %v2306
    %2539 = vmatpush1.bf16.msra.mxu0 %v2305
    %2540 = vmatprep.subr.bf16.mxu0 %v2310
    %2541 = vmatpush1.bf16.msra.mxu0 %v2309
    %2542 = vmatprep.subr.bf16.mxu0 %v2314
    %2543 = vmatpush1.bf16.msra.mxu0 %v2313
    %2544 = vmatprep.subr.bf16.mxu0 %v2318
    %2545 = vmatpush1.bf16.msra.mxu0 %v2317
    %2546 = vmatprep.subr.bf16.mxu0 %v2322
    %2547 = vmatpush1.bf16.msra.mxu0 %v2321
    %2548 = vmatprep.subr.bf16.mxu0 %v2326
    %2549 = vmatpush1.bf16.msra.mxu0 %v2325
    %2550 = vmatprep.subr.bf16.mxu0 %v2330
    %2551 = vmatpush1.bf16.msra.mxu0 %v2329
    %2552 = vmatprep.subr.bf16.mxu0 %v2334
    %2553 = vmatpush1.bf16.msra.mxu0 %v2333
    %2554 = vmatprep.subr.bf16.mxu0 %v2338
    %2555 = vmatpush1.bf16.msra.mxu0 %v2337
    %2556 = vmatprep.subr.bf16.mxu0 %v2342
    %2557 = vmatpush1.bf16.msra.mxu0 %v2341
    %2558 = vmatprep.subr.bf16.mxu0 %v2346
    %2559 = vmatpush1.bf16.msra.mxu0 %v2345
    %2560 = vmatprep.subr.bf16.mxu0 %v2350
    %2561 = vmatpush1.bf16.msra.mxu0 %v2349
    %2562 = vmatprep.subr.bf16.mxu0 %v2354
    %2563 = vmatpush1.bf16.msra.mxu0 %v2353
    %2564 = vmatprep.subr.bf16.mxu0 %v2358
    %2565 = vmatpush1.bf16.msra.mxu0 %v2357
    %2566 = vmatprep.subr.bf16.mxu0 %v2362
    %2567 = vmatpush1.bf16.msra.mxu0 %v2361
    %2568 = vmatprep.subr.bf16.mxu0 %v2366
    %2569 = vmatpush1.bf16.msra.mxu0 %v2365
    %2570 = vmatprep.mubr.bf16.mxu0 %v1706
    %2571 = vmatmul.mubr.bf16.gmra.mrb[0].mxu0 %v1705
    %v2572 = vpop.f32.mrb[0].mxu0
    %v2573 = vadd.f32 %v2532, %v2572
    %v2574 = vpop.f32.mrb[0].mxu0
    %v2575 = vadd.f32 %v2534, %v2574
    %v2576 = vpop.f32.mrb[0].mxu0
    %v2577 = vpop.f32.mrb[0].mxu0
    %2578 = vdwg.mxu0
    %2579 = vmatprep.subr.bf16.mxu0 %v2244
    %2580 = vmatpush1.bf16.msra.mxu0 %v2243
    %2581 = vmatprep.subr.bf16.mxu0 %v2248
    %2582 = vmatpush1.bf16.msra.mxu0 %v2247
    %2583 = vmatprep.subr.bf16.mxu0 %v2252
    %2584 = vmatpush1.bf16.msra.mxu0 %v2251
    %2585 = vmatprep.subr.bf16.mxu0 %v2256
    %2586 = vmatpush1.bf16.msra.mxu0 %v2255
    %2587 = vmatprep.subr.bf16.mxu0 %v2260
    %2588 = vmatpush1.bf16.msra.mxu0 %v2259
    %2589 = vmatprep.subr.bf16.mxu0 %v2264
    %2590 = vmatpush1.bf16.msra.mxu0 %v2263
    %2591 = vmatprep.subr.bf16.mxu0 %v2268
    %2592 = vmatpush1.bf16.msra.mxu0 %v2267
    %2593 = vmatprep.subr.bf16.mxu0 %v2272
    %2594 = vmatpush1.bf16.msra.mxu0 %v2271
    %2595 = vmatprep.subr.bf16.mxu0 %v2276
    %2596 = vmatpush1.bf16.msra.mxu0 %v2275
    %2597 = vmatprep.subr.bf16.mxu0 %v2280
    %2598 = vmatpush1.bf16.msra.mxu0 %v2279
    %2599 = vmatprep.subr.bf16.mxu0 %v2284
    %2600 = vmatpush1.bf16.msra.mxu0 %v2283
    %2601 = vmatprep.subr.bf16.mxu0 %v2288
    %2602 = vmatpush1.bf16.msra.mxu0 %v2287
    %2603 = vmatprep.subr.bf16.mxu0 %v2292
    %2604 = vmatpush1.bf16.msra.mxu0 %v2291
    %2605 = vmatprep.subr.bf16.mxu0 %v2296
    %2606 = vmatpush1.bf16.msra.mxu0 %v2295
    %2607 = vmatprep.subr.bf16.mxu0 %v2300
    %2608 = vmatpush1.bf16.msra.mxu0 %v2299
    %2609 = vmatprep.subr.bf16.mxu0 %v2304
    %2610 = vmatpush1.bf16.msra.mxu0 %v2303
    %2611 = vmatprep.mubr.bf16.mxu0 %v1704
    %2612 = vmatmul.mubr.bf16.gmra.mrb[0].mxu0 %v1703
    %v2613 = vpop.f32.mrb[0].mxu0
    %v2614 = vadd.f32 %v1848, %v2613
    %v2615 = vpop.f32.mrb[0].mxu0
    %v2616 = vadd.f32 %v1852, %v2615
    %v2617 = vpop.f32.mrb[0].mxu0
    %v2618 = vpop.f32.mrb[0].mxu0
    %2619 = vdwg.mxu0
    %2620 = vmatprep.subr.bf16.mxu0 %v2308
    %2621 = vmatpush1.bf16.msra.mxu0 %v2307
    %2622 = vmatprep.subr.bf16.mxu0 %v2312
    %2623 = vmatpush1.bf16.msra.mxu0 %v2311
    %2624 = vmatprep.subr.bf16.mxu0 %v2316
    %2625 = vmatpush1.bf16.msra.mxu0 %v2315
    %2626 = vmatprep.subr.bf16.mxu0 %v2320
    %2627 = vmatpush1.bf16.msra.mxu0 %v2319
    %2628 = vmatprep.subr.bf16.mxu0 %v2324
    %2629 = vmatpush1.bf16.msra.mxu0 %v2323
    %2630 = vmatprep.subr.bf16.mxu0 %v2328
    %2631 = vmatpush1.bf16.msra.mxu0 %v2327
    %2632 = vmatprep.subr.bf16.mxu0 %v2332
    %2633 = vmatpush1.bf16.msra.mxu0 %v2331
    %2634 = vmatprep.subr.bf16.mxu0 %v2336
    %2635 = vmatpush1.bf16.msra.mxu0 %v2335
    %2636 = vmatprep.subr.bf16.mxu0 %v2340
    %2637 = vmatpush1.bf16.msra.mxu0 %v2339
    %2638 = vmatprep.subr.bf16.mxu0 %v2344
    %2639 = vmatpush1.bf16.msra.mxu0 %v2343
    %2640 = vmatprep.subr.bf16.mxu0 %v2348
    %2641 = vmatpush1.bf16.msra.mxu0 %v2347
    %2642 = vmatprep.subr.bf16.mxu0 %v2352
    %2643 = vmatpush1.bf16.msra.mxu0 %v2351
    %2644 = vmatprep.subr.bf16.mxu0 %v2356
    %2645 = vmatpush1.bf16.msra.mxu0 %v2355
    %2646 = vmatprep.subr.bf16.mxu0 %v2360
    %2647 = vmatpush1.bf16.msra.mxu0 %v2359
    %2648 = vmatprep.subr.bf16.mxu0 %v2364
    %2649 = vmatpush1.bf16.msra.mxu0 %v2363
    %2650 = vmatprep.subr.bf16.mxu0 %v2368
    %2651 = vmatpush1.bf16.msra.mxu0 %v2367
    %2652 = vmatprep.mubr.bf16.mxu0 %v1706
    %2653 = vmatmul.mubr.bf16.gmra.mrb[0].mxu0 %v1705
    %v2654 = vpop.f32.mrb[0].mxu0
    %v2655 = vadd.f32 %v2614, %v2654
    %v2656 = vpop.f32.mrb[0].mxu0
    %v2657 = vadd.f32 %v2616, %v2656
    %v2658 = vpop.f32.mrb[0].mxu0
    %v2659 = vpop.f32.mrb[0].mxu0
    %2660 = vdwg.mxu0
    %v2661 = vmax.f32 %v2573, 0.0
    %v2662 = vmax.f32 %v2575, 0.0
    %v2663 = vmax.f32 %v2655, 0.0
    %v2664 = vmax.f32 %v2657, 0.0
    %v2665 = vpack.c.bf16 %v2661, %v2661
    %v2666 = vpack.c.bf16 %v2662, %v2662
    %v2667 = vpack.c.bf16 %v2663, %v2663
    %v2668 = vpack.c.bf16 %v2664, %v2664
    %v2669 = vld [vmem:[#allocation6] sm:$0xf]
    %v2670 = vld [vmem:[#allocation6 + $0x4] sm:$0xf]
    %v2671 = vld [vmem:[#allocation6 + $0x8] sm:$0xf]
    %v2672 = vld [vmem:[#allocation6 + $0xc] sm:$0xf]
    %v2673 = vld [vmem:[#allocation6 + $0x10] sm:$0xf]
    %v2674 = vld [vmem:[#allocation6 + $0x14] sm:$0xf]
    %v2675 = vld [vmem:[#allocation6 + $0x18] sm:$0xf]
    %v2676 = vld [vmem:[#allocation6 + $0x1c] sm:$0xf]
    %v2677 = vld [vmem:[#allocation6 + $0x20] sm:$0xf]
    %v2678 = vld [vmem:[#allocation6 + $0x24] sm:$0xf]
    %v2679 = vld [vmem:[#allocation6 + $0x28] sm:$0xf]
    %v2680 = vld [vmem:[#allocation6 + $0x2c] sm:$0xf]
    %v2681 = vld [vmem:[#allocation6 + $0x30] sm:$0xf]
    %v2682 = vld [vmem:[#allocation6 + $0x34] sm:$0xf]
    %v2683 = vld [vmem:[#allocation6 + $0x38] sm:$0xf]
    %v2684 = vld [vmem:[#allocation6 + $0x3c] sm:$0xf]
    %v2685 = vld [vmem:[#allocation6 + $0x40] sm:$0xf]
    %v2686 = vld [vmem:[#allocation6 + $0x44] sm:$0xf]
    %v2687 = vld [vmem:[#allocation6 + $0x48] sm:$0xf]
    %v2688 = vld [vmem:[#allocation6 + $0x4c] sm:$0xf]
    %v2689 = vld [vmem:[#allocation6 + $0x50] sm:$0xf]
    %v2690 = vld [vmem:[#allocation6 + $0x54] sm:$0xf]
    %v2691 = vld [vmem:[#allocation6 + $0x58] sm:$0xf]
    %v2692 = vld [vmem:[#allocation6 + $0x5c] sm:$0xf]
    %v2693 = vld [vmem:[#allocation6 + $0x60] sm:$0xf]
    %v2694 = vld [vmem:[#allocation6 + $0x64] sm:$0xf]
    %v2695 = vld [vmem:[#allocation6 + $0x68] sm:$0xf]
    %v2696 = vld [vmem:[#allocation6 + $0x6c] sm:$0xf]
    %v2697 = vld [vmem:[#allocation6 + $0x70] sm:$0xf]
    %v2698 = vld [vmem:[#allocation6 + $0x74] sm:$0xf]
    %v2699 = vld [vmem:[#allocation6 + $0x78] sm:$0xf]
    %v2700 = vld [vmem:[#allocation6 + $0x7c] sm:$0xf]
    %v2701 = vld [vmem:[#allocation6 + $0x80] sm:$0xf]
    %v2702 = vld [vmem:[#allocation6 + $0x84] sm:$0xf]
    %v2703 = vld [vmem:[#allocation6 + $0x88] sm:$0xf]
    %v2704 = vld [vmem:[#allocation6 + $0x8c] sm:$0xf]
    %v2705 = vld [vmem:[#allocation6 + $0x90] sm:$0xf]
    %v2706 = vld [vmem:[#allocation6 + $0x94] sm:$0xf]
    %v2707 = vld [vmem:[#allocation6 + $0x98] sm:$0xf]
    %v2708 = vld [vmem:[#allocation6 + $0x9c] sm:$0xf]
    %v2709 = vld [vmem:[#allocation6 + $0xa0] sm:$0xf]
    %v2710 = vld [vmem:[#allocation6 + $0xa4] sm:$0xf]
    %v2711 = vld [vmem:[#allocation6 + $0xa8] sm:$0xf]
    %v2712 = vld [vmem:[#allocation6 + $0xac] sm:$0xf]
    %v2713 = vld [vmem:[#allocation6 + $0xb0] sm:$0xf]
    %v2714 = vld [vmem:[#allocation6 + $0xb4] sm:$0xf]
    %v2715 = vld [vmem:[#allocation6 + $0xb8] sm:$0xf]
    %v2716 = vld [vmem:[#allocation6 + $0xbc] sm:$0xf]
    %v2717 = vld [vmem:[#allocation6 + $0xc0] sm:$0xf]
    %v2718 = vld [vmem:[#allocation6 + $0xc4] sm:$0xf]
    %v2719 = vld [vmem:[#allocation6 + $0xc8] sm:$0xf]
    %v2720 = vld [vmem:[#allocation6 + $0xcc] sm:$0xf]
    %v2721 = vld [vmem:[#allocation6 + $0xd0] sm:$0xf]
    %v2722 = vld [vmem:[#allocation6 + $0xd4] sm:$0xf]
    %v2723 = vld [vmem:[#allocation6 + $0xd8] sm:$0xf]
    %v2724 = vld [vmem:[#allocation6 + $0xdc] sm:$0xf]
    %v2725 = vld [vmem:[#allocation6 + $0xe0] sm:$0xf]
    %v2726 = vld [vmem:[#allocation6 + $0xe4] sm:$0xf]
    %v2727 = vld [vmem:[#allocation6 + $0xe8] sm:$0xf]
    %v2728 = vld [vmem:[#allocation6 + $0xec] sm:$0xf]
    %v2729 = vld [vmem:[#allocation6 + $0xf0] sm:$0xf]
    %v2730 = vld [vmem:[#allocation6 + $0xf4] sm:$0xf]
    %v2731 = vld [vmem:[#allocation6 + $0xf8] sm:$0xf]
    %v2732 = vld [vmem:[#allocation6 + $0xfc] sm:$0xf]
    %v2733 = vld [vmem:[%s6] sm:$0x1]
    %v2735 = vlaneseq
    %v2736 = vshrl.u32 %v2735, 7
    %v2737 = vsub.s32 0, %v2736
    %v2738 = vrot.slane %v2733, %v2737
    %v2804 = vunpack.c.l.b16 %v2669
    %v2805 = vunpack.c.l.b16 %v2670
    %v2806 = vunpack.c.l.b16 %v2671
    %v2807 = vunpack.c.l.b16 %v2672
    %v2808 = vunpack.c.l.b16 %v2673
    %v2809 = vunpack.c.l.b16 %v2674
    %v2810 = vunpack.c.l.b16 %v2675
    %v2811 = vunpack.c.l.b16 %v2676
    %v2812 = vunpack.c.l.b16 %v2677
    %v2813 = vunpack.c.l.b16 %v2678
    %v2814 = vunpack.c.l.b16 %v2679
    %v2815 = vunpack.c.l.b16 %v2680
    %v2816 = vunpack.c.l.b16 %v2681
    %v2817 = vunpack.c.l.b16 %v2682
    %v2818 = vunpack.c.l.b16 %v2683
    %v2819 = vunpack.c.l.b16 %v2684
    %v2820 = vunpack.c.l.b16 %v2685
    %v2821 = vunpack.c.l.b16 %v2686
    %v2822 = vunpack.c.l.b16 %v2687
    %v2823 = vunpack.c.l.b16 %v2688
    %v2824 = vunpack.c.l.b16 %v2689
    %v2825 = vunpack.c.l.b16 %v2690
    %v2826 = vunpack.c.l.b16 %v2691
    %v2827 = vunpack.c.l.b16 %v2692
    %v2828 = vunpack.c.l.b16 %v2693
    %v2829 = vunpack.c.l.b16 %v2694
    %v2830 = vunpack.c.l.b16 %v2695
    %v2831 = vunpack.c.l.b16 %v2696
    %v2832 = vunpack.c.l.b16 %v2697
    %v2833 = vunpack.c.l.b16 %v2698
    %v2834 = vunpack.c.l.b16 %v2699
    %v2835 = vunpack.c.l.b16 %v2700
    %v2836 = vunpack.c.l.b16 %v2701
    %v2837 = vunpack.c.l.b16 %v2702
    %v2838 = vunpack.c.l.b16 %v2703
    %v2839 = vunpack.c.l.b16 %v2704
    %v2840 = vunpack.c.l.b16 %v2705
    %v2841 = vunpack.c.l.b16 %v2706
    %v2842 = vunpack.c.l.b16 %v2707
    %v2843 = vunpack.c.l.b16 %v2708
    %v2844 = vunpack.c.l.b16 %v2709
    %v2845 = vunpack.c.l.b16 %v2710
    %v2846 = vunpack.c.l.b16 %v2711
    %v2847 = vunpack.c.l.b16 %v2712
    %v2848 = vunpack.c.l.b16 %v2713
    %v2849 = vunpack.c.l.b16 %v2714
    %v2850 = vunpack.c.l.b16 %v2715
    %v2851 = vunpack.c.l.b16 %v2716
    %v2852 = vunpack.c.l.b16 %v2717
    %v2853 = vunpack.c.l.b16 %v2718
    %v2854 = vunpack.c.l.b16 %v2719
    %v2855 = vunpack.c.l.b16 %v2720
    %v2856 = vunpack.c.l.b16 %v2721
    %v2857 = vunpack.c.l.b16 %v2722
    %v2858 = vunpack.c.l.b16 %v2723
    %v2859 = vunpack.c.l.b16 %v2724
    %v2860 = vunpack.c.l.b16 %v2725
    %v2861 = vunpack.c.l.b16 %v2726
    %v2862 = vunpack.c.l.b16 %v2727
    %v2863 = vunpack.c.l.b16 %v2728
    %v2864 = vunpack.c.l.b16 %v2729
    %v2865 = vunpack.c.l.b16 %v2730
    %v2866 = vunpack.c.l.b16 %v2731
    %v2867 = vunpack.c.l.b16 %v2732
    %v2868 = vpack.c.b16 %v2805, %v2804
    %v2869 = vpack.c.b16 %v2807, %v2806
    %v2870 = vpack.c.b16 %v2809, %v2808
    %v2871 = vpack.c.b16 %v2811, %v2810
    %v2872 = vpack.c.b16 %v2813, %v2812
    %v2873 = vpack.c.b16 %v2815, %v2814
    %v2874 = vpack.c.b16 %v2817, %v2816
    %v2875 = vpack.c.b16 %v2819, %v2818
    %v2876 = vpack.c.b16 %v2821, %v2820
    %v2877 = vpack.c.b16 %v2823, %v2822
    %v2878 = vpack.c.b16 %v2825, %v2824
    %v2879 = vpack.c.b16 %v2827, %v2826
    %v2880 = vpack.c.b16 %v2829, %v2828
    %v2881 = vpack.c.b16 %v2831, %v2830
    %v2882 = vpack.c.b16 %v2833, %v2832
    %v2883 = vpack.c.b16 %v2835, %v2834
    %v2884 = vpack.c.b16 %v2837, %v2836
    %v2885 = vpack.c.b16 %v2839, %v2838
    %v2886 = vpack.c.b16 %v2841, %v2840
    %v2887 = vpack.c.b16 %v2843, %v2842
    %v2888 = vpack.c.b16 %v2845, %v2844
    %v2889 = vpack.c.b16 %v2847, %v2846
    %v2890 = vpack.c.b16 %v2849, %v2848
    %v2891 = vpack.c.b16 %v2851, %v2850
    %v2892 = vpack.c.b16 %v2853, %v2852
    %v2893 = vpack.c.b16 %v2855, %v2854
    %v2894 = vpack.c.b16 %v2857, %v2856
    %v2895 = vpack.c.b16 %v2859, %v2858
    %v2896 = vpack.c.b16 %v2861, %v2860
    %v2897 = vpack.c.b16 %v2863, %v2862
    %v2898 = vpack.c.b16 %v2865, %v2864
    %v2899 = vpack.c.b16 %v2867, %v2866
    %2932 = vmatprep.subr.bf16.mxu0 0
    %2933 = vmatpush1.bf16.msra.mxu0 %v2868
    %2934 = vmatprep.subr.bf16.mxu0 0
    %2935 = vmatpush1.bf16.msra.mxu0 %v2869
    %2936 = vmatprep.subr.bf16.mxu0 0
    %2937 = vmatpush1.bf16.msra.mxu0 %v2870
    %2938 = vmatprep.subr.bf16.mxu0 0
    %2939 = vmatpush1.bf16.msra.mxu0 %v2871
    %2940 = vmatprep.subr.bf16.mxu0 0
    %2941 = vmatpush1.bf16.msra.mxu0 %v2872
    %2942 = vmatprep.subr.bf16.mxu0 0
    %2943 = vmatpush1.bf16.msra.mxu0 %v2873
    %2944 = vmatprep.subr.bf16.mxu0 0
    %2945 = vmatpush1.bf16.msra.mxu0 %v2874
    %2946 = vmatprep.subr.bf16.mxu0 0
    %2947 = vmatpush1.bf16.msra.mxu0 %v2875
    %2948 = vmatprep.subr.bf16.mxu0 0
    %2949 = vmatpush1.bf16.msra.mxu0 %v2876
    %2950 = vmatprep.subr.bf16.mxu0 0
    %2951 = vmatpush1.bf16.msra.mxu0 %v2877
    %2952 = vmatprep.subr.bf16.mxu0 0
    %2953 = vmatpush1.bf16.msra.mxu0 %v2878
    %2954 = vmatprep.subr.bf16.mxu0 0
    %2955 = vmatpush1.bf16.msra.mxu0 %v2879
    %2956 = vmatprep.subr.bf16.mxu0 0
    %2957 = vmatpush1.bf16.msra.mxu0 %v2880
    %2958 = vmatprep.subr.bf16.mxu0 0
    %2959 = vmatpush1.bf16.msra.mxu0 %v2881
    %2960 = vmatprep.subr.bf16.mxu0 0
    %2961 = vmatpush1.bf16.msra.mxu0 %v2882
    %2962 = vmatprep.subr.bf16.mxu0 0
    %2963 = vmatpush1.bf16.msra.mxu0 %v2883
    %2964 = vmatprep.mubr.bf16.mxu0 %v2666
    %2965 = vmatmul.mubr.bf16.gmra.mrb[0].mxu0 %v2665
    %v2966 = vpop.f32.mrb[0].mxu0
    %v2967 = vadd.f32 %v2738, %v2966
    %v2968 = vpop.f32.mrb[0].mxu0
    %v2969 = vpop.f32.mrb[0].mxu0
    %v2970 = vpop.f32.mrb[0].mxu0
    %2971 = vdwg.mxu0
    %2972 = vmatprep.subr.bf16.mxu0 0
    %2973 = vmatpush1.bf16.msra.mxu0 %v2884
    %2974 = vmatprep.subr.bf16.mxu0 0
    %2975 = vmatpush1.bf16.msra.mxu0 %v2885
    %2976 = vmatprep.subr.bf16.mxu0 0
    %2977 = vmatpush1.bf16.msra.mxu0 %v2886
    %2978 = vmatprep.subr.bf16.mxu0 0
    %2979 = vmatpush1.bf16.msra.mxu0 %v2887
    %2980 = vmatprep.subr.bf16.mxu0 0
    %2981 = vmatpush1.bf16.msra.mxu0 %v2888
    %2982 = vmatprep.subr.bf16.mxu0 0
    %2983 = vmatpush1.bf16.msra.mxu0 %v2889
    %2984 = vmatprep.subr.bf16.mxu0 0
    %2985 = vmatpush1.bf16.msra.mxu0 %v2890
    %2986 = vmatprep.subr.bf16.mxu0 0
    %2987 = vmatpush1.bf16.msra.mxu0 %v2891
    %2988 = vmatprep.subr.bf16.mxu0 0
    %2989 = vmatpush1.bf16.msra.mxu0 %v2892
    %2990 = vmatprep.subr.bf16.mxu0 0
    %2991 = vmatpush1.bf16.msra.mxu0 %v2893
    %2992 = vmatprep.subr.bf16.mxu0 0
    %2993 = vmatpush1.bf16.msra.mxu0 %v2894
    %2994 = vmatprep.subr.bf16.mxu0 0
    %2995 = vmatpush1.bf16.msra.mxu0 %v2895
    %2996 = vmatprep.subr.bf16.mxu0 0
    %2997 = vmatpush1.bf16.msra.mxu0 %v2896
    %2998 = vmatprep.subr.bf16.mxu0 0
    %2999 = vmatpush1.bf16.msra.mxu0 %v2897
    %3000 = vmatprep.subr.bf16.mxu0 0
    %3001 = vmatpush1.bf16.msra.mxu0 %v2898
    %3002 = vmatprep.subr.bf16.mxu0 0
    %3003 = vmatpush1.bf16.msra.mxu0 %v2899
    %3004 = vmatprep.mubr.bf16.mxu0 %v2668
    %3005 = vmatmul.mubr.bf16.gmra.mrb[0].mxu0 %v2667
    %v3006 = vpop.f32.mrb[0].mxu0
    %v3007 = vadd.f32 %v2967, %v3006
    %v3008 = vpop.f32.mrb[0].mxu0
    %v3009 = vpop.f32.mrb[0].mxu0
    %v3010 = vpop.f32.mrb[0].mxu0
    %3011 = vdwg.mxu0
    %v3012 = vpack.c.bf16 %v3007, %v3007
    %v3015 = vunpack.c.l.s4 1966171168
    %v3016 = vunpack.c.0.s8 %v3015
    %v3017 = vlaneseq
    %v3018 = vshrl.u32 %v3017, 7
    %v3019 = vsub.s32 %v3016, %v3018
    %v3020 = vrot.slane %v3012, %v3019
    %v3021 = vcombine.high %v3020, %v3020
    %v3023 = vunpack.c.l.s4 1966171168
    %v3024 = vunpack.c.0.s8 %v3023
    %v3025 = vlaneseq
    %v3026 = vshrl.u32 %v3025, 7
    %v3027 = vsub.s32 %v3024, %v3026
    %v3028 = vrot.slane %v3020, %v3027
    %v3030 = vunpack.c.l.s4 1966171168
    %v3031 = vunpack.c.0.s8 %v3030
    %v3032 = vlaneseq
    %v3033 = vshrl.u32 %v3032, 7
    %v3034 = vsub.s32 %v3031, %v3033
    %v3035 = vrot.slane %v3021, %v3034
    %v3036 = vcombine.high %v3028, %v3028
    %v3037 = vcombine.high %v3035, %v3035
    %3042 = vst [vmem:[#allocation7] sm:$0x1] %v3028
    %3043 = vst [vmem:[#allocation7 + $0x1] sm:$0x1] %v3035
    %3044 = vst [vmem:[#allocation7 + $0x2] sm:$0x1] %v3036
    %3045 = vst [vmem:[#allocation7 + $0x3] sm:$0x1] %v3037
    // Predicated region
    $region42: #{net_forward.1} parent=1 // pred_check
      _
    $region43: #{net_forward.1} parent=1 // pred_check_branch
      %3047 = sbr.rel (0) target = $region45
    $region44: #{net_forward.1} parent=1 // pred_region
      // Predicated region
      $region46: #{net_forward.1} parent=44 // pred_check
        _
      $region47: #{net_forward.1} parent=44 // pred_check_branch
        %3049 = sbr.rel (0) target = $region49
      $region48: #{net_forward.1} parent=44 // pred_region
        // Predicated region
        $region50: #{net_forward.1} parent=48 // pred_check
          _
        $region51: #{net_forward.1} parent=48 // pred_check_branch
          %3051 = sbr.rel target = $region53
        $region52: #{net_forward.1} parent=48 // pred_region
          // Predicated region
          $region65: #{net_forward.1} parent=52 // pred_check
            _
          $region66: #{net_forward.1} parent=52 // pred_check_branch
            %3066 = sbr.rel (0) target = $region68
          $region67: #{net_forward.1} parent=52 // pred_region
            loop: start=0, step=1, limit=1
            $region69: #{net_forward.1} parent=67 // loop_pre_header
              _
            $region70: #{net_forward.1} parent=67 // loop_header
              %s3069 = sphi 0, %s3073
              %p3070 = scmp.ge.s32.totalorder %s3069, 1
              %s3074 = sphi [#allocation7], [#allocation7]
              %s3075 = sphi %s7, %s7
            $region71: #{net_forward.1} parent=67 // loop_header_branch
              %3072 = sbr.rel (%p3070) target = $region75
            $region72: #{net_forward.1} parent=67 // loop_body
              %v3076 = vld [vmem:[%s3074] sm:$0x1]
              %3077 = vst [vmem:[%s3075] sm:$0x1] %v3076
            $region73: #{net_forward.1} parent=67 // loop_footer
              %s3073 = sadd.s32 1, %s3069
            $region74: #{net_forward.1} parent=67 // loop_footer_branch
              %3068 = sbr.rel target = $region70
            $region75: #{net_forward.1} parent=67 // loop_exit
              _
          $region68: #{net_forward.1} parent=52 // pred_fallthru
            _
        $region53: #{net_forward.1} parent=48 // pred_fallthru
          _
        // Predicated region
        $region54: #{net_forward.1} parent=48 // pred_check
          _
        $region55: #{net_forward.1} parent=48 // pred_check_branch
          %3053 = sbr.rel (0) target = $region57
        $region56: #{net_forward.1} parent=48 // pred_region
          loop: start=0, step=1, limit=1
          $region58: #{net_forward.1} parent=56 // loop_pre_header
            _
          $region59: #{net_forward.1} parent=56 // loop_header
            %s3056 = sphi 0, %s3060
            %p3057 = scmp.ge.s32.totalorder %s3056, 1
            %s3061 = sphi [#allocation7], [#allocation7]
            %s3062 = sphi %s7, %s7
          $region60: #{net_forward.1} parent=56 // loop_header_branch
            %3059 = sbr.rel (%p3057) target = $region64
          $region61: #{net_forward.1} parent=56 // loop_body
            %v3063 = vld [vmem:[%s3061] sm:$0x1]
            %3064 = vst [vmem:[%s3062] sm:$0x1] %v3063
          $region62: #{net_forward.1} parent=56 // loop_footer
            %s3060 = sadd.s32 1, %s3056
          $region63: #{net_forward.1} parent=56 // loop_footer_branch
            %3055 = sbr.rel target = $region59
          $region64: #{net_forward.1} parent=56 // loop_exit
            _
        $region57: #{net_forward.1} parent=48 // pred_fallthru
          _
      $region49: #{net_forward.1} parent=44 // pred_fallthru
        _
      %3078 = vnop
    $region45: #{net_forward.1} parent=1 // pred_fallthru
      _
    // Predicated region
    $region76: #{net_forward.1} parent=1 // pred_check
      _
    $region77: #{net_forward.1} parent=1 // pred_check_branch
      %3080 = sbr.rel (0) target = $region79
    $region78: #{net_forward.1} parent=1 // pred_region
      _
    $region79: #{net_forward.1} parent=1 // pred_fallthru
      _
    %3081 = vsyncpa [#allocation3], 1
    %3082 = vsyncpa [#allocation5], 1

</llo_original>
